<compile_context>
chip_gen: v7x
topology: tpu7x:2x2x1
jax: 0.10.0
libtpu: 0.0.40
codegen_flags: <defaults>
</compile_context>

<pallas_src>
import math

import jax
import jax.numpy as jnp
from jax import lax
from jax.experimental import pallas as pl
from jax.experimental.pallas import tpu as pltpu


def _acrnn_kernel(
    # inputs
    obs_ref, dones_ref, h0_ref,
    emb_w_ref, emb_b_ref,
    wi3_ref, bi3_ref, wh3_ref, bhn_ref,
    h1w_ref, h1b_ref, a2w_ref, a2b_ref, c2w_ref, c2b_ref,
    # outputs
    logits_ref, v_ref,
    # scratch
    gx_scr, emb_scr,
):
    B, H = h0_ref.shape
    TB = gx_scr.shape[0]
    T = TB // B
    MLPH = a2w_ref.shape[0]

    # ---- 1) embed + relu, then the HOISTED input-side gate projection:
    #         two big (T*B, .) matmuls, off the serial critical path. ----
    x = jnp.maximum(
        jnp.dot(obs_ref[...], emb_w_ref[...], preferred_element_type=jnp.float32)
        + emb_b_ref[...], 0.0)
    gx_scr[...] = (
        jnp.dot(x, wi3_ref[...], preferred_element_type=jnp.float32) + bi3_ref[...])

    # ---- 2) GRU scan with reset masking.  Per step only one fused
    #         (B, H) @ (H, 3H) hidden-side matmul remains. ----
    def step(t, h):
        row = pl.multiple_of(t * B, B)
        reset = dones_ref[pl.ds(row, B), :]                       # (B, 1)
        h = jnp.where(reset != 0.0, 0.0, h)
        gx = gx_scr[pl.ds(row, B), :]                             # (B, 3H)
        gh = jnp.dot(h, wh3_ref[...], preferred_element_type=jnp.float32)
        r = jax.nn.sigmoid(gx[:, 0:H] + gh[:, 0:H])
        z = jax.nn.sigmoid(gx[:, H:2 * H] + gh[:, H:2 * H])
        n = jnp.tanh(gx[:, 2 * H:3 * H] + r * (gh[:, 2 * H:3 * H] + bhn_ref[...]))
        h_new = (1.0 - z) * n + z * h
        emb_scr[pl.ds(row, B), :] = h_new
        return h_new

    lax.fori_loop(0, T, step, h0_ref[...], unroll=True)

    emb2d = emb_scr[...]                                          # (T*B, H)

    # ---- 3) actor + critic heads; both fc1 layers fused into one matmul ----
    h1 = jnp.maximum(
        jnp.dot(emb2d, h1w_ref[...], preferred_element_type=jnp.float32)
        + h1b_ref[...], 0.0)                                      # (T*B, 2*MLPH)
    ah = h1[:, 0:MLPH]
    ch = h1[:, MLPH:2 * MLPH]
    logits_ref[...] = (
        jnp.dot(ah, a2w_ref[...], preferred_element_type=jnp.float32) + a2b_ref[...])
    v_ref[...] = (
        jnp.dot(ch, c2w_ref[...], preferred_element_type=jnp.float32) + c2b_ref[...])


def discrete_actor_critic_rnn_forward(packed, hidden, obs, dones):
    T, B, Din = obs.shape
    H = hidden.shape[1]
    MLPH, OUT = packed["a2_wT"].shape

    obs2d = obs.reshape(T * B, Din).astype(jnp.float32)
    dones2d = dones.reshape(T * B, 1).astype(jnp.float32)

    inputs = (
        obs2d, dones2d, hidden,
        packed["emb_wT"], packed["emb_b"],
        packed["w_i3"], packed["b_i3"], packed["w_h3"], packed["b_hn"],
        packed["head1_wT"], packed["head1_b"],
        packed["a2_wT"], packed["a2_b"], packed["c2_wT"], packed["c2_b"],
    )

    vmem = pl.BlockSpec(memory_space=pltpu.MemorySpace.VMEM)

    logits2d, v2d = pl.pallas_call(
        _acrnn_kernel,
        out_shape=(jax.ShapeDtypeStruct((T * B, OUT), jnp.float32),
                   jax.ShapeDtypeStruct((T * B, 1), jnp.float32)),
        in_specs=[vmem] * len(inputs),
        out_specs=(vmem, vmem),
        scratch_shapes=[
            pltpu.VMEM((T * B, 3 * H), jnp.float32),  # hoisted gate pre-activations
            pltpu.VMEM((T * B, H), jnp.float32),      # GRU outputs ("embedding")
        ],
    )(*inputs)

    # The module returns the *input* hidden state unchanged: pass it through in
    # the wrapper (no kernel copy, no HBM writeback needed).
    return hidden, logits2d.reshape(T, B, OUT), v2d.reshape(T, B, 1)


def init_params(key, input_size, action_dim, hidden_size=32, mlp_hidden=128):
    """Raw (per-gate / per-layer) parameters matching the PyTorch module."""
    ks = jax.random.split(key, 9)

    def ortho(k, scale, shape):
        return jax.nn.initializers.orthogonal(scale)(k, shape, jnp.float32)

    H = hidden_size
    # embed: Linear(input_size, hidden), orthogonal(sqrt(2)), bias 0
    emb_w = ortho(ks[0], math.sqrt(2.0), (H, input_size))
    # GRUCell(hidden, hidden): PyTorch default uniform(-k, k), k = 1/sqrt(hidden)
    kb = 1.0 / math.sqrt(H)
    w_ih = jax.random.uniform(ks[1], (3 * H, H), jnp.float32, -kb, kb)
    w_hh = jax.random.uniform(ks[2], (3 * H, H), jnp.float32, -kb, kb)
    b_ih = jax.random.uniform(ks[3], (3 * H,), jnp.float32, -kb, kb)
    b_hh = jax.random.uniform(ks[4], (3 * H,), jnp.float32, -kb, kb)
    # actor (as written): fc1 Linear(action_dim, 128) ortho(2.0); fc2 Linear(128, hidden) ortho(0.01)
    a1_w = ortho(ks[5], 2.0, (mlp_hidden, action_dim))
    a2_w = ortho(ks[6], 0.01, (H, mlp_hidden))
    # critic: fc1 Linear(hidden, 128) ortho(2.0); fc2 Linear(128, 1) ortho(1.0)
    c1_w = ortho(ks[7], 2.0, (mlp_hidden, H))
    c2_w = ortho(ks[8], 1.0, (1, mlp_hidden))

    def row(v):
        return v.reshape(1, -1)

    return dict(
        emb_wT=emb_w.T, emb_b=jnp.zeros((1, H), jnp.float32),
        w_ir_T=w_ih[0:H].T, w_iz_T=w_ih[H:2 * H].T, w_in_T=w_ih[2 * H:3 * H].T,
        w_hr_T=w_hh[0:H].T, w_hz_T=w_hh[H:2 * H].T, w_hn_T=w_hh[2 * H:3 * H].T,
        b_ir=row(b_ih[0:H]), b_iz=row(b_ih[H:2 * H]), b_in=row(b_ih[2 * H:3 * H]),
        b_hr=row(b_hh[0:H]), b_hz=row(b_hh[H:2 * H]), b_hn=row(b_hh[2 * H:3 * H]),
        a1_wT=a1_w.T, a1_b=jnp.zeros((1, mlp_hidden), jnp.float32),
        a2_wT=a2_w.T, a2_b=jnp.zeros((1, H), jnp.float32),
        c1_wT=c1_w.T, c1_b=jnp.zeros((1, mlp_hidden), jnp.float32),
        c2_wT=c2_w.T, c2_b=jnp.zeros((1, 1), jnp.float32),
    )


def pack_params(p):
    """Fuse per-gate / per-head parameters into the kernel's packed layout."""
    # Actor fc1 is declared Linear(action_dim, 128) but consumes the embedding
    # (hidden_size features): only valid when action_dim == hidden_size.
    assert p["a1_wT"].shape[0] == p["c1_wT"].shape[0], (
        "as-written PyTorch module requires action_dim == hidden_size")
    w_i3 = jnp.concatenate([p["w_ir_T"], p["w_iz_T"], p["w_in_T"]], axis=1)
    w_h3 = jnp.concatenate([p["w_hr_T"], p["w_hz_T"], p["w_hn_T"]], axis=1)
    # r/z hidden-side biases don't interact with r, so fold them into the
    # hoisted input-side projection; the n hidden bias stays inside r*(...).
    b_i3 = jnp.concatenate(
        [p["b_ir"] + p["b_hr"], p["b_iz"] + p["b_hz"], p["b_in"]], axis=1)
    head1_wT = jnp.concatenate([p["a1_wT"], p["c1_wT"]], axis=1)
    head1_b = jnp.concatenate([p["a1_b"], p["c1_b"]], axis=1)
    return dict(
        emb_wT=p["emb_wT"], emb_b=p["emb_b"],
        w_i3=w_i3, b_i3=b_i3, w_h3=w_h3, b_hn=p["b_hn"],
        head1_wT=head1_wT, head1_b=head1_b,
        a2_wT=p["a2_wT"], a2_b=p["a2_b"],
        c2_wT=p["c2_wT"], c2_b=p["c2_b"],
    )


def ref_forward(params, hidden, obs, dones):
    """Pure-JAX reference mirroring the PyTorch forward semantics."""
    T, _, _ = obs.shape
    x = jax.nn.relu(obs @ params["emb_wT"] + params["emb_b"][0])
    h = hidden
    outs = []
    for t in range(T):
        h = jnp.where(dones[t][:, None] != 0, jnp.zeros_like(h), h)
        xt = x[t]
        r = jax.nn.sigmoid(xt @ params["w_ir_T"] + params["b_ir"][0]
                           + h @ params["w_hr_T"] + params["b_hr"][0])
        z = jax.nn.sigmoid(xt @ params["w_iz_T"] + params["b_iz"][0]
                           + h @ params["w_hz_T"] + params["b_hz"][0])
        n = jnp.tanh(xt @ params["w_in_T"] + params["b_in"][0]
                     + r * (h @ params["w_hn_T"] + params["b_hn"][0]))
        h = (1.0 - z) * n + z * h
        outs.append(h)
    emb = jnp.stack(outs, axis=0)
    ah = jax.nn.relu(emb @ params["a1_wT"] + params["a1_b"][0])
    logits = ah @ params["a2_wT"] + params["a2_b"][0]
    ch = jax.nn.relu(emb @ params["c1_wT"] + params["c1_b"][0])
    v = ch @ params["c2_wT"] + params["c2_b"][0]
    return hidden, logits, v


if __name__ == "__main__":
    key = jax.random.PRNGKey(0)
    T, B = 8, 8                       # B=8 keeps per-step row slices sublane-aligned
    input_size, hidden_size = 16, 32
    action_dim = 32                   # must equal hidden_size for the as-written module

    kp, ko, kd, kh = jax.random.split(key, 4)
    raw = init_params(kp, input_size, action_dim, hidden_size)
    packed = pack_params(raw)
    obs = jax.random.normal(ko, (T, B, input_size), jnp.float32)
    dones = (jax.random.uniform(kd, (T, B)) < 0.25).astype(jnp.float32)
    hidden = jax.random.normal(kh, (B, hidden_size), jnp.float32)

    h_out, logits, values = discrete_actor_critic_rnn_forward(packed, hidden, obs, dones)
    jax.block_until_ready((h_out, logits, values))

    h_ref, logits_r, v_r = ref_forward(raw, hidden, obs, dones)
    assert h_out.shape == (B, hidden_size)
    assert logits.shape == (T, B, hidden_size)
    assert values.shape == (T, B, 1)
    assert jnp.allclose(h_out, h_ref, atol=1e-5)
    assert jnp.allclose(logits, logits_r, atol=1e-4)
    assert jnp.allclose(values, v_r, atol=1e-4)
    print("KERNEL_OK")
</pallas_src>

<mosaic_0001>
module attributes {stable_mosaic.version = 11 : i64} {
  func.func @_acrnn_kernel(%arg0: memref<64x16xf32, #tpu.memory_space<vmem>>, %arg1: memref<64x1xf32, #tpu.memory_space<vmem>>, %arg2: memref<8x32xf32, #tpu.memory_space<vmem>>, %arg3: memref<16x32xf32, #tpu.memory_space<vmem>>, %arg4: memref<1x32xf32, #tpu.memory_space<vmem>>, %arg5: memref<32x96xf32, #tpu.memory_space<vmem>>, %arg6: memref<1x96xf32, #tpu.memory_space<vmem>>, %arg7: memref<32x96xf32, #tpu.memory_space<vmem>>, %arg8: memref<1x32xf32, #tpu.memory_space<vmem>>, %arg9: memref<32x256xf32, #tpu.memory_space<vmem>>, %arg10: memref<1x256xf32, #tpu.memory_space<vmem>>, %arg11: memref<128x32xf32, #tpu.memory_space<vmem>>, %arg12: memref<1x32xf32, #tpu.memory_space<vmem>>, %arg13: memref<128x1xf32, #tpu.memory_space<vmem>>, %arg14: memref<1x1xf32, #tpu.memory_space<vmem>>, %arg15: memref<64x32xf32, #tpu.memory_space<vmem>>, %arg16: memref<64x1xf32, #tpu.memory_space<vmem>>, %arg17: memref<64x96xf32, #tpu.memory_space<vmem>>, %arg18: memref<64x32xf32, #tpu.memory_space<vmem>>) attributes {dimension_semantics = [], scalar_prefetch = 0 : i64, scratch_operands = 2 : i64, tpu.core_type = #tpu.core_type<tc>} {
    %c0 = arith.constant 0 : index
    %c0_0 = arith.constant 0 : index
    %0 = vector.load %arg0[%c0, %c0_0] : memref<64x16xf32, #tpu.memory_space<vmem>>, vector<64x16xf32>
    %c0_1 = arith.constant 0 : index
    %c0_2 = arith.constant 0 : index
    %1 = vector.load %arg3[%c0_1, %c0_2] : memref<16x32xf32, #tpu.memory_space<vmem>>, vector<16x32xf32>
    %cst = arith.constant dense<0.000000e+00> : vector<64x32xf32>
    %2 = tpu.matmul %0, %1, %cst {dimension_numbers = #tpu.dot_dimension_numbers<[1], [0], [0], [1], [0, 0, 1, 1], [], []>} : vector<64x16xf32>, vector<16x32xf32>, vector<64x32xf32> -> vector<64x32xf32>
    %c0_3 = arith.constant 0 : index
    %c0_4 = arith.constant 0 : index
    %3 = vector.load %arg4[%c0_3, %c0_4] : memref<1x32xf32, #tpu.memory_space<vmem>>, vector<1x32xf32>
    %4 = vector.broadcast %3 : vector<1x32xf32> to vector<64x32xf32>
    %5 = arith.addf %2, %4 : vector<64x32xf32>
    %cst_5 = arith.constant 0.000000e+00 : f32
    %6 = vector.broadcast %cst_5 : f32 to vector<64x32xf32>
    %7 = arith.maximumf %5, %6 : vector<64x32xf32>
    %c0_6 = arith.constant 0 : index
    %c0_7 = arith.constant 0 : index
    %8 = vector.load %arg5[%c0_6, %c0_7] : memref<32x96xf32, #tpu.memory_space<vmem>>, vector<32x96xf32>
    %cst_8 = arith.constant dense<0.000000e+00> : vector<64x96xf32>
    %9 = tpu.matmul %7, %8, %cst_8 {dimension_numbers = #tpu.dot_dimension_numbers<[1], [0], [0], [1], [0, 0, 1, 1], [], []>} : vector<64x32xf32>, vector<32x96xf32>, vector<64x96xf32> -> vector<64x96xf32>
    %c0_9 = arith.constant 0 : index
    %c0_10 = arith.constant 0 : index
    %10 = vector.load %arg6[%c0_9, %c0_10] : memref<1x96xf32, #tpu.memory_space<vmem>>, vector<1x96xf32>
    %11 = vector.broadcast %10 : vector<1x96xf32> to vector<64x96xf32>
    %12 = arith.addf %9, %11 : vector<64x96xf32>
    %c0_11 = arith.constant 0 : index
    %c0_12 = arith.constant 0 : index
    %13 = vector.load %arg17[%c0_11, %c0_12] : memref<64x96xf32, #tpu.memory_space<vmem>>, vector<64x96xf32>
    tpu.vector_store %arg17[%c0_11, %c0_12], %12 {strides = array<i32>} : memref<64x96xf32, #tpu.memory_space<vmem>>, vector<64x96xf32>,
    %c0_13 = arith.constant 0 : index
    %c0_14 = arith.constant 0 : index
    %14 = vector.load %arg2[%c0_13, %c0_14] : memref<8x32xf32, #tpu.memory_space<vmem>>, vector<8x32xf32>
    %c0_i32 = arith.constant 0 : i32
    %c8_i32 = arith.constant 8 : i32
    %15 = arith.muli %c0_i32, %c8_i32 : i32
    %16 = tpu.assume_multiple %15, 8 : i32
    %17 = arith.index_cast %16 : i32 to index
    %c0_15 = arith.constant 0 : index
    %18 = vector.load %arg1[%17, %c0_15] : memref<64x1xf32, #tpu.memory_space<vmem>>, vector<8x1xf32>
    %cst_16 = arith.constant 0.000000e+00 : f32
    %19 = vector.broadcast %cst_16 : f32 to vector<8x1xf32>
    %20 = arith.cmpf one, %18, %19 : vector<8x1xf32>
    %cst_17 = arith.constant 0.000000e+00 : f32
    %21 = vector.shape_cast %20 : vector<8x1xi1> to vector<8x1xi1>
    %22 = vector.broadcast %21 : vector<8x1xi1> to vector<8x32xi1>
    %23 = vector.broadcast %cst_17 : f32 to vector<8x32xf32>
    %24 = arith.select %22, %23, %14 : vector<8x32xi1>, vector<8x32xf32>
    %25 = arith.index_cast %16 : i32 to index
    %c0_18 = arith.constant 0 : index
    %26 = vector.load %arg17[%25, %c0_18] : memref<64x96xf32, #tpu.memory_space<vmem>>, vector<8x96xf32>
    %c0_19 = arith.constant 0 : index
    %c0_20 = arith.constant 0 : index
    %27 = vector.load %arg7[%c0_19, %c0_20] : memref<32x96xf32, #tpu.memory_space<vmem>>, vector<32x96xf32>
    %cst_21 = arith.constant dense<0.000000e+00> : vector<8x96xf32>
    %28 = tpu.matmul %24, %27, %cst_21 {dimension_numbers = #tpu.dot_dimension_numbers<[1], [0], [0], [1], [0, 0, 1, 1], [], []>} : vector<8x32xf32>, vector<32x96xf32>, vector<8x96xf32> -> vector<8x96xf32>
    %29 = vector.extract_strided_slice %26 {offsets = [0, 0], sizes = [8, 32], strides = [1, 1]} : vector<8x96xf32> to vector<8x32xf32>
    %30 = vector.extract_strided_slice %28 {offsets = [0, 0], sizes = [8, 32], strides = [1, 1]} : vector<8x96xf32> to vector<8x32xf32>
    %31 = arith.addf %29, %30 : vector<8x32xf32>
    %32 = arith.negf %31 : vector<8x32xf32>
    %33 = math.exp %32 : vector<8x32xf32>
    %cst_22 = arith.constant 1.000000e+00 : f32
    %34 = vector.broadcast %cst_22 : f32 to vector<8x32xf32>
    %35 = arith.addf %34, %33 : vector<8x32xf32>
    %36 = arith.divf %34, %35 : vector<8x32xf32>
    %37 = vector.extract_strided_slice %26 {offsets = [0, 32], sizes = [8, 32], strides = [1, 1]} : vector<8x96xf32> to vector<8x32xf32>
    %38 = vector.extract_strided_slice %28 {offsets = [0, 32], sizes = [8, 32], strides = [1, 1]} : vector<8x96xf32> to vector<8x32xf32>
    %39 = arith.addf %37, %38 : vector<8x32xf32>
    %40 = arith.negf %39 : vector<8x32xf32>
    %41 = math.exp %40 : vector<8x32xf32>
    %cst_23 = arith.constant 1.000000e+00 : f32
    %42 = vector.broadcast %cst_23 : f32 to vector<8x32xf32>
    %43 = arith.addf %42, %41 : vector<8x32xf32>
    %44 = arith.divf %42, %43 : vector<8x32xf32>
    %45 = vector.extract_strided_slice %26 {offsets = [0, 64], sizes = [8, 32], strides = [1, 1]} : vector<8x96xf32> to vector<8x32xf32>
    %46 = vector.extract_strided_slice %28 {offsets = [0, 64], sizes = [8, 32], strides = [1, 1]} : vector<8x96xf32> to vector<8x32xf32>
    %c0_24 = arith.constant 0 : index
    %c0_25 = arith.constant 0 : index
    %47 = vector.load %arg8[%c0_24, %c0_25] : memref<1x32xf32, #tpu.memory_space<vmem>>, vector<1x32xf32>
    %48 = vector.broadcast %47 : vector<1x32xf32> to vector<8x32xf32>
    %49 = arith.addf %46, %48 : vector<8x32xf32>
    %50 = arith.mulf %36, %49 : vector<8x32xf32>
    %51 = arith.addf %45, %50 : vector<8x32xf32>
    %52 = math.tanh %51 : vector<8x32xf32>
    %cst_26 = arith.constant 1.000000e+00 : f32
    %53 = vector.broadcast %cst_26 : f32 to vector<8x32xf32>
    %54 = arith.subf %53, %44 : vector<8x32xf32>
    %55 = arith.mulf %54, %52 : vector<8x32xf32>
    %56 = arith.mulf %44, %24 : vector<8x32xf32>
    %57 = arith.addf %55, %56 : vector<8x32xf32>
    %58 = arith.index_cast %16 : i32 to index
    %c0_27 = arith.constant 0 : index
    %59 = vector.load %arg18[%58, %c0_27] : memref<64x32xf32, #tpu.memory_space<vmem>>, vector<8x32xf32>
    tpu.vector_store %arg18[%58, %c0_27], %57 {strides = array<i32>} : memref<64x32xf32, #tpu.memory_space<vmem>>, vector<8x32xf32>,
    %c1_i32 = arith.constant 1 : i32
    %c8_i32_28 = arith.constant 8 : i32
    %60 = arith.muli %c1_i32, %c8_i32_28 : i32
    %61 = tpu.assume_multiple %60, 8 : i32
    %62 = arith.index_cast %61 : i32 to index
    %c0_29 = arith.constant 0 : index
    %63 = vector.load %arg1[%62, %c0_29] : memref<64x1xf32, #tpu.memory_space<vmem>>, vector<8x1xf32>
    %cst_30 = arith.constant 0.000000e+00 : f32
    %64 = vector.broadcast %cst_30 : f32 to vector<8x1xf32>
    %65 = arith.cmpf one, %63, %64 : vector<8x1xf32>
    %cst_31 = arith.constant 0.000000e+00 : f32
    %66 = vector.shape_cast %65 : vector<8x1xi1> to vector<8x1xi1>
    %67 = vector.broadcast %66 : vector<8x1xi1> to vector<8x32xi1>
    %68 = vector.broadcast %cst_31 : f32 to vector<8x32xf32>
    %69 = arith.select %67, %68, %57 : vector<8x32xi1>, vector<8x32xf32>
    %70 = arith.index_cast %61 : i32 to index
    %c0_32 = arith.constant 0 : index
    %71 = vector.load %arg17[%70, %c0_32] : memref<64x96xf32, #tpu.memory_space<vmem>>, vector<8x96xf32>
    %c0_33 = arith.constant 0 : index
    %c0_34 = arith.constant 0 : index
    %72 = vector.load %arg7[%c0_33, %c0_34] : memref<32x96xf32, #tpu.memory_space<vmem>>, vector<32x96xf32>
    %cst_35 = arith.constant dense<0.000000e+00> : vector<8x96xf32>
    %73 = tpu.matmul %69, %72, %cst_35 {dimension_numbers = #tpu.dot_dimension_numbers<[1], [0], [0], [1], [0, 0, 1, 1], [], []>} : vector<8x32xf32>, vector<32x96xf32>, vector<8x96xf32> -> vector<8x96xf32>
    %74 = vector.extract_strided_slice %71 {offsets = [0, 0], sizes = [8, 32], strides = [1, 1]} : vector<8x96xf32> to vector<8x32xf32>
    %75 = vector.extract_strided_slice %73 {offsets = [0, 0], sizes = [8, 32], strides = [1, 1]} : vector<8x96xf32> to vector<8x32xf32>
    %76 = arith.addf %74, %75 : vector<8x32xf32>
    %77 = arith.negf %76 : vector<8x32xf32>
    %78 = math.exp %77 : vector<8x32xf32>
    %cst_36 = arith.constant 1.000000e+00 : f32
    %79 = vector.broadcast %cst_36 : f32 to vector<8x32xf32>
    %80 = arith.addf %79, %78 : vector<8x32xf32>
    %81 = arith.divf %79, %80 : vector<8x32xf32>
    %82 = vector.extract_strided_slice %71 {offsets = [0, 32], sizes = [8, 32], strides = [1, 1]} : vector<8x96xf32> to vector<8x32xf32>
    %83 = vector.extract_strided_slice %73 {offsets = [0, 32], sizes = [8, 32], strides = [1, 1]} : vector<8x96xf32> to vector<8x32xf32>
    %84 = arith.addf %82, %83 : vector<8x32xf32>
    %85 = arith.negf %84 : vector<8x32xf32>
    %86 = math.exp %85 : vector<8x32xf32>
    %cst_37 = arith.constant 1.000000e+00 : f32
    %87 = vector.broadcast %cst_37 : f32 to vector<8x32xf32>
    %88 = arith.addf %87, %86 : vector<8x32xf32>
    %89 = arith.divf %87, %88 : vector<8x32xf32>
    %90 = vector.extract_strided_slice %71 {offsets = [0, 64], sizes = [8, 32], strides = [1, 1]} : vector<8x96xf32> to vector<8x32xf32>
    %91 = vector.extract_strided_slice %73 {offsets = [0, 64], sizes = [8, 32], strides = [1, 1]} : vector<8x96xf32> to vector<8x32xf32>
    %c0_38 = arith.constant 0 : index
    %c0_39 = arith.constant 0 : index
    %92 = vector.load %arg8[%c0_38, %c0_39] : memref<1x32xf32, #tpu.memory_space<vmem>>, vector<1x32xf32>
    %93 = vector.broadcast %92 : vector<1x32xf32> to vector<8x32xf32>
    %94 = arith.addf %91, %93 : vector<8x32xf32>
    %95 = arith.mulf %81, %94 : vector<8x32xf32>
    %96 = arith.addf %90, %95 : vector<8x32xf32>
    %97 = math.tanh %96 : vector<8x32xf32>
    %cst_40 = arith.constant 1.000000e+00 : f32
    %98 = vector.broadcast %cst_40 : f32 to vector<8x32xf32>
    %99 = arith.subf %98, %89 : vector<8x32xf32>
    %100 = arith.mulf %99, %97 : vector<8x32xf32>
    %101 = arith.mulf %89, %69 : vector<8x32xf32>
    %102 = arith.addf %100, %101 : vector<8x32xf32>
    %103 = arith.index_cast %61 : i32 to index
    %c0_41 = arith.constant 0 : index
    %104 = vector.load %arg18[%103, %c0_41] : memref<64x32xf32, #tpu.memory_space<vmem>>, vector<8x32xf32>
    tpu.vector_store %arg18[%103, %c0_41], %102 {strides = array<i32>} : memref<64x32xf32, #tpu.memory_space<vmem>>, vector<8x32xf32>,
    %c2_i32 = arith.constant 2 : i32
    %c8_i32_42 = arith.constant 8 : i32
    %105 = arith.muli %c2_i32, %c8_i32_42 : i32
    %106 = tpu.assume_multiple %105, 8 : i32
    %107 = arith.index_cast %106 : i32 to index
    %c0_43 = arith.constant 0 : index
    %108 = vector.load %arg1[%107, %c0_43] : memref<64x1xf32, #tpu.memory_space<vmem>>, vector<8x1xf32>
    %cst_44 = arith.constant 0.000000e+00 : f32
    %109 = vector.broadcast %cst_44 : f32 to vector<8x1xf32>
    %110 = arith.cmpf one, %108, %109 : vector<8x1xf32>
    %cst_45 = arith.constant 0.000000e+00 : f32
    %111 = vector.shape_cast %110 : vector<8x1xi1> to vector<8x1xi1>
    %112 = vector.broadcast %111 : vector<8x1xi1> to vector<8x32xi1>
    %113 = vector.broadcast %cst_45 : f32 to vector<8x32xf32>
    %114 = arith.select %112, %113, %102 : vector<8x32xi1>, vector<8x32xf32>
    %115 = arith.index_cast %106 : i32 to index
    %c0_46 = arith.constant 0 : index
    %116 = vector.load %arg17[%115, %c0_46] : memref<64x96xf32, #tpu.memory_space<vmem>>, vector<8x96xf32>
    %c0_47 = arith.constant 0 : index
    %c0_48 = arith.constant 0 : index
    %117 = vector.load %arg7[%c0_47, %c0_48] : memref<32x96xf32, #tpu.memory_space<vmem>>, vector<32x96xf32>
    %cst_49 = arith.constant dense<0.000000e+00> : vector<8x96xf32>
    %118 = tpu.matmul %114, %117, %cst_49 {dimension_numbers = #tpu.dot_dimension_numbers<[1], [0], [0], [1], [0, 0, 1, 1], [], []>} : vector<8x32xf32>, vector<32x96xf32>, vector<8x96xf32> -> vector<8x96xf32>
    %119 = vector.extract_strided_slice %116 {offsets = [0, 0], sizes = [8, 32], strides = [1, 1]} : vector<8x96xf32> to vector<8x32xf32>
    %120 = vector.extract_strided_slice %118 {offsets = [0, 0], sizes = [8, 32], strides = [1, 1]} : vector<8x96xf32> to vector<8x32xf32>
    %121 = arith.addf %119, %120 : vector<8x32xf32>
    %122 = arith.negf %121 : vector<8x32xf32>
    %123 = math.exp %122 : vector<8x32xf32>
    %cst_50 = arith.constant 1.000000e+00 : f32
    %124 = vector.broadcast %cst_50 : f32 to vector<8x32xf32>
    %125 = arith.addf %124, %123 : vector<8x32xf32>
    %126 = arith.divf %124, %125 : vector<8x32xf32>
    %127 = vector.extract_strided_slice %116 {offsets = [0, 32], sizes = [8, 32], strides = [1, 1]} : vector<8x96xf32> to vector<8x32xf32>
    %128 = vector.extract_strided_slice %118 {offsets = [0, 32], sizes = [8, 32], strides = [1, 1]} : vector<8x96xf32> to vector<8x32xf32>
    %129 = arith.addf %127, %128 : vector<8x32xf32>
    %130 = arith.negf %129 : vector<8x32xf32>
    %131 = math.exp %130 : vector<8x32xf32>
    %cst_51 = arith.constant 1.000000e+00 : f32
    %132 = vector.broadcast %cst_51 : f32 to vector<8x32xf32>
    %133 = arith.addf %132, %131 : vector<8x32xf32>
    %134 = arith.divf %132, %133 : vector<8x32xf32>
    %135 = vector.extract_strided_slice %116 {offsets = [0, 64], sizes = [8, 32], strides = [1, 1]} : vector<8x96xf32> to vector<8x32xf32>
    %136 = vector.extract_strided_slice %118 {offsets = [0, 64], sizes = [8, 32], strides = [1, 1]} : vector<8x96xf32> to vector<8x32xf32>
    %c0_52 = arith.constant 0 : index
    %c0_53 = arith.constant 0 : index
    %137 = vector.load %arg8[%c0_52, %c0_53] : memref<1x32xf32, #tpu.memory_space<vmem>>, vector<1x32xf32>
    %138 = vector.broadcast %137 : vector<1x32xf32> to vector<8x32xf32>
    %139 = arith.addf %136, %138 : vector<8x32xf32>
    %140 = arith.mulf %126, %139 : vector<8x32xf32>
    %141 = arith.addf %135, %140 : vector<8x32xf32>
    %142 = math.tanh %141 : vector<8x32xf32>
    %cst_54 = arith.constant 1.000000e+00 : f32
    %143 = vector.broadcast %cst_54 : f32 to vector<8x32xf32>
    %144 = arith.subf %143, %134 : vector<8x32xf32>
    %145 = arith.mulf %144, %142 : vector<8x32xf32>
    %146 = arith.mulf %134, %114 : vector<8x32xf32>
    %147 = arith.addf %145, %146 : vector<8x32xf32>
    %148 = arith.index_cast %106 : i32 to index
    %c0_55 = arith.constant 0 : index
    %149 = vector.load %arg18[%148, %c0_55] : memref<64x32xf32, #tpu.memory_space<vmem>>, vector<8x32xf32>
    tpu.vector_store %arg18[%148, %c0_55], %147 {strides = array<i32>} : memref<64x32xf32, #tpu.memory_space<vmem>>, vector<8x32xf32>,
    %c3_i32 = arith.constant 3 : i32
    %c8_i32_56 = arith.constant 8 : i32
    %150 = arith.muli %c3_i32, %c8_i32_56 : i32
    %151 = tpu.assume_multiple %150, 8 : i32
    %152 = arith.index_cast %151 : i32 to index
    %c0_57 = arith.constant 0 : index
    %153 = vector.load %arg1[%152, %c0_57] : memref<64x1xf32, #tpu.memory_space<vmem>>, vector<8x1xf32>
    %cst_58 = arith.constant 0.000000e+00 : f32
    %154 = vector.broadcast %cst_58 : f32 to vector<8x1xf32>
    %155 = arith.cmpf one, %153, %154 : vector<8x1xf32>
    %cst_59 = arith.constant 0.000000e+00 : f32
    %156 = vector.shape_cast %155 : vector<8x1xi1> to vector<8x1xi1>
    %157 = vector.broadcast %156 : vector<8x1xi1> to vector<8x32xi1>
    %158 = vector.broadcast %cst_59 : f32 to vector<8x32xf32>
    %159 = arith.select %157, %158, %147 : vector<8x32xi1>, vector<8x32xf32>
    %160 = arith.index_cast %151 : i32 to index
    %c0_60 = arith.constant 0 : index
    %161 = vector.load %arg17[%160, %c0_60] : memref<64x96xf32, #tpu.memory_space<vmem>>, vector<8x96xf32>
    %c0_61 = arith.constant 0 : index
    %c0_62 = arith.constant 0 : index
    %162 = vector.load %arg7[%c0_61, %c0_62] : memref<32x96xf32, #tpu.memory_space<vmem>>, vector<32x96xf32>
    %cst_63 = arith.constant dense<0.000000e+00> : vector<8x96xf32>
    %163 = tpu.matmul %159, %162, %cst_63 {dimension_numbers = #tpu.dot_dimension_numbers<[1], [0], [0], [1], [0, 0, 1, 1], [], []>} : vector<8x32xf32>, vector<32x96xf32>, vector<8x96xf32> -> vector<8x96xf32>
    %164 = vector.extract_strided_slice %161 {offsets = [0, 0], sizes = [8, 32], strides = [1, 1]} : vector<8x96xf32> to vector<8x32xf32>
    %165 = vector.extract_strided_slice %163 {offsets = [0, 0], sizes = [8, 32], strides = [1, 1]} : vector<8x96xf32> to vector<8x32xf32>
    %166 = arith.addf %164, %165 : vector<8x32xf32>
    %167 = arith.negf %166 : vector<8x32xf32>
    %168 = math.exp %167 : vector<8x32xf32>
    %cst_64 = arith.constant 1.000000e+00 : f32
    %169 = vector.broadcast %cst_64 : f32 to vector<8x32xf32>
    %170 = arith.addf %169, %168 : vector<8x32xf32>
    %171 = arith.divf %169, %170 : vector<8x32xf32>
    %172 = vector.extract_strided_slice %161 {offsets = [0, 32], sizes = [8, 32], strides = [1, 1]} : vector<8x96xf32> to vector<8x32xf32>
    %173 = vector.extract_strided_slice %163 {offsets = [0, 32], sizes = [8, 32], strides = [1, 1]} : vector<8x96xf32> to vector<8x32xf32>
    %174 = arith.addf %172, %173 : vector<8x32xf32>
    %175 = arith.negf %174 : vector<8x32xf32>
    %176 = math.exp %175 : vector<8x32xf32>
    %cst_65 = arith.constant 1.000000e+00 : f32
    %177 = vector.broadcast %cst_65 : f32 to vector<8x32xf32>
    %178 = arith.addf %177, %176 : vector<8x32xf32>
    %179 = arith.divf %177, %178 : vector<8x32xf32>
    %180 = vector.extract_strided_slice %161 {offsets = [0, 64], sizes = [8, 32], strides = [1, 1]} : vector<8x96xf32> to vector<8x32xf32>
    %181 = vector.extract_strided_slice %163 {offsets = [0, 64], sizes = [8, 32], strides = [1, 1]} : vector<8x96xf32> to vector<8x32xf32>
    %c0_66 = arith.constant 0 : index
    %c0_67 = arith.constant 0 : index
    %182 = vector.load %arg8[%c0_66, %c0_67] : memref<1x32xf32, #tpu.memory_space<vmem>>, vector<1x32xf32>
    %183 = vector.broadcast %182 : vector<1x32xf32> to vector<8x32xf32>
    %184 = arith.addf %181, %183 : vector<8x32xf32>
    %185 = arith.mulf %171, %184 : vector<8x32xf32>
    %186 = arith.addf %180, %185 : vector<8x32xf32>
    %187 = math.tanh %186 : vector<8x32xf32>
    %cst_68 = arith.constant 1.000000e+00 : f32
    %188 = vector.broadcast %cst_68 : f32 to vector<8x32xf32>
    %189 = arith.subf %188, %179 : vector<8x32xf32>
    %190 = arith.mulf %189, %187 : vector<8x32xf32>
    %191 = arith.mulf %179, %159 : vector<8x32xf32>
    %192 = arith.addf %190, %191 : vector<8x32xf32>
    %193 = arith.index_cast %151 : i32 to index
    %c0_69 = arith.constant 0 : index
    %194 = vector.load %arg18[%193, %c0_69] : memref<64x32xf32, #tpu.memory_space<vmem>>, vector<8x32xf32>
    tpu.vector_store %arg18[%193, %c0_69], %192 {strides = array<i32>} : memref<64x32xf32, #tpu.memory_space<vmem>>, vector<8x32xf32>,
    %c4_i32 = arith.constant 4 : i32
    %c8_i32_70 = arith.constant 8 : i32
    %195 = arith.muli %c4_i32, %c8_i32_70 : i32
    %196 = tpu.assume_multiple %195, 8 : i32
    %197 = arith.index_cast %196 : i32 to index
    %c0_71 = arith.constant 0 : index
    %198 = vector.load %arg1[%197, %c0_71] : memref<64x1xf32, #tpu.memory_space<vmem>>, vector<8x1xf32>
    %cst_72 = arith.constant 0.000000e+00 : f32
    %199 = vector.broadcast %cst_72 : f32 to vector<8x1xf32>
    %200 = arith.cmpf one, %198, %199 : vector<8x1xf32>
    %cst_73 = arith.constant 0.000000e+00 : f32
    %201 = vector.shape_cast %200 : vector<8x1xi1> to vector<8x1xi1>
    %202 = vector.broadcast %201 : vector<8x1xi1> to vector<8x32xi1>
    %203 = vector.broadcast %cst_73 : f32 to vector<8x32xf32>
    %204 = arith.select %202, %203, %192 : vector<8x32xi1>, vector<8x32xf32>
    %205 = arith.index_cast %196 : i32 to index
    %c0_74 = arith.constant 0 : index
    %206 = vector.load %arg17[%205, %c0_74] : memref<64x96xf32, #tpu.memory_space<vmem>>, vector<8x96xf32>
    %c0_75 = arith.constant 0 : index
    %c0_76 = arith.constant 0 : index
    %207 = vector.load %arg7[%c0_75, %c0_76] : memref<32x96xf32, #tpu.memory_space<vmem>>, vector<32x96xf32>
    %cst_77 = arith.constant dense<0.000000e+00> : vector<8x96xf32>
    %208 = tpu.matmul %204, %207, %cst_77 {dimension_numbers = #tpu.dot_dimension_numbers<[1], [0], [0], [1], [0, 0, 1, 1], [], []>} : vector<8x32xf32>, vector<32x96xf32>, vector<8x96xf32> -> vector<8x96xf32>
    %209 = vector.extract_strided_slice %206 {offsets = [0, 0], sizes = [8, 32], strides = [1, 1]} : vector<8x96xf32> to vector<8x32xf32>
    %210 = vector.extract_strided_slice %208 {offsets = [0, 0], sizes = [8, 32], strides = [1, 1]} : vector<8x96xf32> to vector<8x32xf32>
    %211 = arith.addf %209, %210 : vector<8x32xf32>
    %212 = arith.negf %211 : vector<8x32xf32>
    %213 = math.exp %212 : vector<8x32xf32>
    %cst_78 = arith.constant 1.000000e+00 : f32
    %214 = vector.broadcast %cst_78 : f32 to vector<8x32xf32>
    %215 = arith.addf %214, %213 : vector<8x32xf32>
    %216 = arith.divf %214, %215 : vector<8x32xf32>
    %217 = vector.extract_strided_slice %206 {offsets = [0, 32], sizes = [8, 32], strides = [1, 1]} : vector<8x96xf32> to vector<8x32xf32>
    %218 = vector.extract_strided_slice %208 {offsets = [0, 32], sizes = [8, 32], strides = [1, 1]} : vector<8x96xf32> to vector<8x32xf32>
    %219 = arith.addf %217, %218 : vector<8x32xf32>
    %220 = arith.negf %219 : vector<8x32xf32>
    %221 = math.exp %220 : vector<8x32xf32>
    %cst_79 = arith.constant 1.000000e+00 : f32
    %222 = vector.broadcast %cst_79 : f32 to vector<8x32xf32>
    %223 = arith.addf %222, %221 : vector<8x32xf32>
    %224 = arith.divf %222, %223 : vector<8x32xf32>
    %225 = vector.extract_strided_slice %206 {offsets = [0, 64], sizes = [8, 32], strides = [1, 1]} : vector<8x96xf32> to vector<8x32xf32>
    %226 = vector.extract_strided_slice %208 {offsets = [0, 64], sizes = [8, 32], strides = [1, 1]} : vector<8x96xf32> to vector<8x32xf32>
    %c0_80 = arith.constant 0 : index
    %c0_81 = arith.constant 0 : index
    %227 = vector.load %arg8[%c0_80, %c0_81] : memref<1x32xf32, #tpu.memory_space<vmem>>, vector<1x32xf32>
    %228 = vector.broadcast %227 : vector<1x32xf32> to vector<8x32xf32>
    %229 = arith.addf %226, %228 : vector<8x32xf32>
    %230 = arith.mulf %216, %229 : vector<8x32xf32>
    %231 = arith.addf %225, %230 : vector<8x32xf32>
    %232 = math.tanh %231 : vector<8x32xf32>
    %cst_82 = arith.constant 1.000000e+00 : f32
    %233 = vector.broadcast %cst_82 : f32 to vector<8x32xf32>
    %234 = arith.subf %233, %224 : vector<8x32xf32>
    %235 = arith.mulf %234, %232 : vector<8x32xf32>
    %236 = arith.mulf %224, %204 : vector<8x32xf32>
    %237 = arith.addf %235, %236 : vector<8x32xf32>
    %238 = arith.index_cast %196 : i32 to index
    %c0_83 = arith.constant 0 : index
    %239 = vector.load %arg18[%238, %c0_83] : memref<64x32xf32, #tpu.memory_space<vmem>>, vector<8x32xf32>
    tpu.vector_store %arg18[%238, %c0_83], %237 {strides = array<i32>} : memref<64x32xf32, #tpu.memory_space<vmem>>, vector<8x32xf32>,
    %c5_i32 = arith.constant 5 : i32
    %c8_i32_84 = arith.constant 8 : i32
    %240 = arith.muli %c5_i32, %c8_i32_84 : i32
    %241 = tpu.assume_multiple %240, 8 : i32
    %242 = arith.index_cast %241 : i32 to index
    %c0_85 = arith.constant 0 : index
    %243 = vector.load %arg1[%242, %c0_85] : memref<64x1xf32, #tpu.memory_space<vmem>>, vector<8x1xf32>
    %cst_86 = arith.constant 0.000000e+00 : f32
    %244 = vector.broadcast %cst_86 : f32 to vector<8x1xf32>
    %245 = arith.cmpf one, %243, %244 : vector<8x1xf32>
    %cst_87 = arith.constant 0.000000e+00 : f32
    %246 = vector.shape_cast %245 : vector<8x1xi1> to vector<8x1xi1>
    %247 = vector.broadcast %246 : vector<8x1xi1> to vector<8x32xi1>
    %248 = vector.broadcast %cst_87 : f32 to vector<8x32xf32>
    %249 = arith.select %247, %248, %237 : vector<8x32xi1>, vector<8x32xf32>
    %250 = arith.index_cast %241 : i32 to index
    %c0_88 = arith.constant 0 : index
    %251 = vector.load %arg17[%250, %c0_88] : memref<64x96xf32, #tpu.memory_space<vmem>>, vector<8x96xf32>
    %c0_89 = arith.constant 0 : index
    %c0_90 = arith.constant 0 : index
    %252 = vector.load %arg7[%c0_89, %c0_90] : memref<32x96xf32, #tpu.memory_space<vmem>>, vector<32x96xf32>
    %cst_91 = arith.constant dense<0.000000e+00> : vector<8x96xf32>
    %253 = tpu.matmul %249, %252, %cst_91 {dimension_numbers = #tpu.dot_dimension_numbers<[1], [0], [0], [1], [0, 0, 1, 1], [], []>} : vector<8x32xf32>, vector<32x96xf32>, vector<8x96xf32> -> vector<8x96xf32>
    %254 = vector.extract_strided_slice %251 {offsets = [0, 0], sizes = [8, 32], strides = [1, 1]} : vector<8x96xf32> to vector<8x32xf32>
    %255 = vector.extract_strided_slice %253 {offsets = [0, 0], sizes = [8, 32], strides = [1, 1]} : vector<8x96xf32> to vector<8x32xf32>
    %256 = arith.addf %254, %255 : vector<8x32xf32>
    %257 = arith.negf %256 : vector<8x32xf32>
    %258 = math.exp %257 : vector<8x32xf32>
    %cst_92 = arith.constant 1.000000e+00 : f32
    %259 = vector.broadcast %cst_92 : f32 to vector<8x32xf32>
    %260 = arith.addf %259, %258 : vector<8x32xf32>
    %261 = arith.divf %259, %260 : vector<8x32xf32>
    %262 = vector.extract_strided_slice %251 {offsets = [0, 32], sizes = [8, 32], strides = [1, 1]} : vector<8x96xf32> to vector<8x32xf32>
    %263 = vector.extract_strided_slice %253 {offsets = [0, 32], sizes = [8, 32], strides = [1, 1]} : vector<8x96xf32> to vector<8x32xf32>
    %264 = arith.addf %262, %263 : vector<8x32xf32>
    %265 = arith.negf %264 : vector<8x32xf32>
    %266 = math.exp %265 : vector<8x32xf32>
    %cst_93 = arith.constant 1.000000e+00 : f32
    %267 = vector.broadcast %cst_93 : f32 to vector<8x32xf32>
    %268 = arith.addf %267, %266 : vector<8x32xf32>
    %269 = arith.divf %267, %268 : vector<8x32xf32>
    %270 = vector.extract_strided_slice %251 {offsets = [0, 64], sizes = [8, 32], strides = [1, 1]} : vector<8x96xf32> to vector<8x32xf32>
    %271 = vector.extract_strided_slice %253 {offsets = [0, 64], sizes = [8, 32], strides = [1, 1]} : vector<8x96xf32> to vector<8x32xf32>
    %c0_94 = arith.constant 0 : index
    %c0_95 = arith.constant 0 : index
    %272 = vector.load %arg8[%c0_94, %c0_95] : memref<1x32xf32, #tpu.memory_space<vmem>>, vector<1x32xf32>
    %273 = vector.broadcast %272 : vector<1x32xf32> to vector<8x32xf32>
    %274 = arith.addf %271, %273 : vector<8x32xf32>
    %275 = arith.mulf %261, %274 : vector<8x32xf32>
    %276 = arith.addf %270, %275 : vector<8x32xf32>
    %277 = math.tanh %276 : vector<8x32xf32>
    %cst_96 = arith.constant 1.000000e+00 : f32
    %278 = vector.broadcast %cst_96 : f32 to vector<8x32xf32>
    %279 = arith.subf %278, %269 : vector<8x32xf32>
    %280 = arith.mulf %279, %277 : vector<8x32xf32>
    %281 = arith.mulf %269, %249 : vector<8x32xf32>
    %282 = arith.addf %280, %281 : vector<8x32xf32>
    %283 = arith.index_cast %241 : i32 to index
    %c0_97 = arith.constant 0 : index
    %284 = vector.load %arg18[%283, %c0_97] : memref<64x32xf32, #tpu.memory_space<vmem>>, vector<8x32xf32>
    tpu.vector_store %arg18[%283, %c0_97], %282 {strides = array<i32>} : memref<64x32xf32, #tpu.memory_space<vmem>>, vector<8x32xf32>,
    %c6_i32 = arith.constant 6 : i32
    %c8_i32_98 = arith.constant 8 : i32
    %285 = arith.muli %c6_i32, %c8_i32_98 : i32
    %286 = tpu.assume_multiple %285, 8 : i32
    %287 = arith.index_cast %286 : i32 to index
    %c0_99 = arith.constant 0 : index
    %288 = vector.load %arg1[%287, %c0_99] : memref<64x1xf32, #tpu.memory_space<vmem>>, vector<8x1xf32>
    %cst_100 = arith.constant 0.000000e+00 : f32
    %289 = vector.broadcast %cst_100 : f32 to vector<8x1xf32>
    %290 = arith.cmpf one, %288, %289 : vector<8x1xf32>
    %cst_101 = arith.constant 0.000000e+00 : f32
    %291 = vector.shape_cast %290 : vector<8x1xi1> to vector<8x1xi1>
    %292 = vector.broadcast %291 : vector<8x1xi1> to vector<8x32xi1>
    %293 = vector.broadcast %cst_101 : f32 to vector<8x32xf32>
    %294 = arith.select %292, %293, %282 : vector<8x32xi1>, vector<8x32xf32>
    %295 = arith.index_cast %286 : i32 to index
    %c0_102 = arith.constant 0 : index
    %296 = vector.load %arg17[%295, %c0_102] : memref<64x96xf32, #tpu.memory_space<vmem>>, vector<8x96xf32>
    %c0_103 = arith.constant 0 : index
    %c0_104 = arith.constant 0 : index
    %297 = vector.load %arg7[%c0_103, %c0_104] : memref<32x96xf32, #tpu.memory_space<vmem>>, vector<32x96xf32>
    %cst_105 = arith.constant dense<0.000000e+00> : vector<8x96xf32>
    %298 = tpu.matmul %294, %297, %cst_105 {dimension_numbers = #tpu.dot_dimension_numbers<[1], [0], [0], [1], [0, 0, 1, 1], [], []>} : vector<8x32xf32>, vector<32x96xf32>, vector<8x96xf32> -> vector<8x96xf32>
    %299 = vector.extract_strided_slice %296 {offsets = [0, 0], sizes = [8, 32], strides = [1, 1]} : vector<8x96xf32> to vector<8x32xf32>
    %300 = vector.extract_strided_slice %298 {offsets = [0, 0], sizes = [8, 32], strides = [1, 1]} : vector<8x96xf32> to vector<8x32xf32>
    %301 = arith.addf %299, %300 : vector<8x32xf32>
    %302 = arith.negf %301 : vector<8x32xf32>
    %303 = math.exp %302 : vector<8x32xf32>
    %cst_106 = arith.constant 1.000000e+00 : f32
    %304 = vector.broadcast %cst_106 : f32 to vector<8x32xf32>
    %305 = arith.addf %304, %303 : vector<8x32xf32>
    %306 = arith.divf %304, %305 : vector<8x32xf32>
    %307 = vector.extract_strided_slice %296 {offsets = [0, 32], sizes = [8, 32], strides = [1, 1]} : vector<8x96xf32> to vector<8x32xf32>
    %308 = vector.extract_strided_slice %298 {offsets = [0, 32], sizes = [8, 32], strides = [1, 1]} : vector<8x96xf32> to vector<8x32xf32>
    %309 = arith.addf %307, %308 : vector<8x32xf32>
    %310 = arith.negf %309 : vector<8x32xf32>
    %311 = math.exp %310 : vector<8x32xf32>
    %cst_107 = arith.constant 1.000000e+00 : f32
    %312 = vector.broadcast %cst_107 : f32 to vector<8x32xf32>
    %313 = arith.addf %312, %311 : vector<8x32xf32>
    %314 = arith.divf %312, %313 : vector<8x32xf32>
    %315 = vector.extract_strided_slice %296 {offsets = [0, 64], sizes = [8, 32], strides = [1, 1]} : vector<8x96xf32> to vector<8x32xf32>
    %316 = vector.extract_strided_slice %298 {offsets = [0, 64], sizes = [8, 32], strides = [1, 1]} : vector<8x96xf32> to vector<8x32xf32>
    %c0_108 = arith.constant 0 : index
    %c0_109 = arith.constant 0 : index
    %317 = vector.load %arg8[%c0_108, %c0_109] : memref<1x32xf32, #tpu.memory_space<vmem>>, vector<1x32xf32>
    %318 = vector.broadcast %317 : vector<1x32xf32> to vector<8x32xf32>
    %319 = arith.addf %316, %318 : vector<8x32xf32>
    %320 = arith.mulf %306, %319 : vector<8x32xf32>
    %321 = arith.addf %315, %320 : vector<8x32xf32>
    %322 = math.tanh %321 : vector<8x32xf32>
    %cst_110 = arith.constant 1.000000e+00 : f32
    %323 = vector.broadcast %cst_110 : f32 to vector<8x32xf32>
    %324 = arith.subf %323, %314 : vector<8x32xf32>
    %325 = arith.mulf %324, %322 : vector<8x32xf32>
    %326 = arith.mulf %314, %294 : vector<8x32xf32>
    %327 = arith.addf %325, %326 : vector<8x32xf32>
    %328 = arith.index_cast %286 : i32 to index
    %c0_111 = arith.constant 0 : index
    %329 = vector.load %arg18[%328, %c0_111] : memref<64x32xf32, #tpu.memory_space<vmem>>, vector<8x32xf32>
    tpu.vector_store %arg18[%328, %c0_111], %327 {strides = array<i32>} : memref<64x32xf32, #tpu.memory_space<vmem>>, vector<8x32xf32>,
    %c7_i32 = arith.constant 7 : i32
    %c8_i32_112 = arith.constant 8 : i32
    %330 = arith.muli %c7_i32, %c8_i32_112 : i32
    %331 = tpu.assume_multiple %330, 8 : i32
    %332 = arith.index_cast %331 : i32 to index
    %c0_113 = arith.constant 0 : index
    %333 = vector.load %arg1[%332, %c0_113] : memref<64x1xf32, #tpu.memory_space<vmem>>, vector<8x1xf32>
    %cst_114 = arith.constant 0.000000e+00 : f32
    %334 = vector.broadcast %cst_114 : f32 to vector<8x1xf32>
    %335 = arith.cmpf one, %333, %334 : vector<8x1xf32>
    %cst_115 = arith.constant 0.000000e+00 : f32
    %336 = vector.shape_cast %335 : vector<8x1xi1> to vector<8x1xi1>
    %337 = vector.broadcast %336 : vector<8x1xi1> to vector<8x32xi1>
    %338 = vector.broadcast %cst_115 : f32 to vector<8x32xf32>
    %339 = arith.select %337, %338, %327 : vector<8x32xi1>, vector<8x32xf32>
    %340 = arith.index_cast %331 : i32 to index
    %c0_116 = arith.constant 0 : index
    %341 = vector.load %arg17[%340, %c0_116] : memref<64x96xf32, #tpu.memory_space<vmem>>, vector<8x96xf32>
    %c0_117 = arith.constant 0 : index
    %c0_118 = arith.constant 0 : index
    %342 = vector.load %arg7[%c0_117, %c0_118] : memref<32x96xf32, #tpu.memory_space<vmem>>, vector<32x96xf32>
    %cst_119 = arith.constant dense<0.000000e+00> : vector<8x96xf32>
    %343 = tpu.matmul %339, %342, %cst_119 {dimension_numbers = #tpu.dot_dimension_numbers<[1], [0], [0], [1], [0, 0, 1, 1], [], []>} : vector<8x32xf32>, vector<32x96xf32>, vector<8x96xf32> -> vector<8x96xf32>
    %344 = vector.extract_strided_slice %341 {offsets = [0, 0], sizes = [8, 32], strides = [1, 1]} : vector<8x96xf32> to vector<8x32xf32>
    %345 = vector.extract_strided_slice %343 {offsets = [0, 0], sizes = [8, 32], strides = [1, 1]} : vector<8x96xf32> to vector<8x32xf32>
    %346 = arith.addf %344, %345 : vector<8x32xf32>
    %347 = arith.negf %346 : vector<8x32xf32>
    %348 = math.exp %347 : vector<8x32xf32>
    %cst_120 = arith.constant 1.000000e+00 : f32
    %349 = vector.broadcast %cst_120 : f32 to vector<8x32xf32>
    %350 = arith.addf %349, %348 : vector<8x32xf32>
    %351 = arith.divf %349, %350 : vector<8x32xf32>
    %352 = vector.extract_strided_slice %341 {offsets = [0, 32], sizes = [8, 32], strides = [1, 1]} : vector<8x96xf32> to vector<8x32xf32>
    %353 = vector.extract_strided_slice %343 {offsets = [0, 32], sizes = [8, 32], strides = [1, 1]} : vector<8x96xf32> to vector<8x32xf32>
    %354 = arith.addf %352, %353 : vector<8x32xf32>
    %355 = arith.negf %354 : vector<8x32xf32>
    %356 = math.exp %355 : vector<8x32xf32>
    %cst_121 = arith.constant 1.000000e+00 : f32
    %357 = vector.broadcast %cst_121 : f32 to vector<8x32xf32>
    %358 = arith.addf %357, %356 : vector<8x32xf32>
    %359 = arith.divf %357, %358 : vector<8x32xf32>
    %360 = vector.extract_strided_slice %341 {offsets = [0, 64], sizes = [8, 32], strides = [1, 1]} : vector<8x96xf32> to vector<8x32xf32>
    %361 = vector.extract_strided_slice %343 {offsets = [0, 64], sizes = [8, 32], strides = [1, 1]} : vector<8x96xf32> to vector<8x32xf32>
    %c0_122 = arith.constant 0 : index
    %c0_123 = arith.constant 0 : index
    %362 = vector.load %arg8[%c0_122, %c0_123] : memref<1x32xf32, #tpu.memory_space<vmem>>, vector<1x32xf32>
    %363 = vector.broadcast %362 : vector<1x32xf32> to vector<8x32xf32>
    %364 = arith.addf %361, %363 : vector<8x32xf32>
    %365 = arith.mulf %351, %364 : vector<8x32xf32>
    %366 = arith.addf %360, %365 : vector<8x32xf32>
    %367 = math.tanh %366 : vector<8x32xf32>
    %cst_124 = arith.constant 1.000000e+00 : f32
    %368 = vector.broadcast %cst_124 : f32 to vector<8x32xf32>
    %369 = arith.subf %368, %359 : vector<8x32xf32>
    %370 = arith.mulf %369, %367 : vector<8x32xf32>
    %371 = arith.mulf %359, %339 : vector<8x32xf32>
    %372 = arith.addf %370, %371 : vector<8x32xf32>
    %373 = arith.index_cast %331 : i32 to index
    %c0_125 = arith.constant 0 : index
    %374 = vector.load %arg18[%373, %c0_125] : memref<64x32xf32, #tpu.memory_space<vmem>>, vector<8x32xf32>
    tpu.vector_store %arg18[%373, %c0_125], %372 {strides = array<i32>} : memref<64x32xf32, #tpu.memory_space<vmem>>, vector<8x32xf32>,
    %c8_i32_126 = arith.constant 8 : i32
    %c0_127 = arith.constant 0 : index
    %c0_128 = arith.constant 0 : index
    %375 = vector.load %arg18[%c0_127, %c0_128] : memref<64x32xf32, #tpu.memory_space<vmem>>, vector<64x32xf32>
    %c0_129 = arith.constant 0 : index
    %c0_130 = arith.constant 0 : index
    %376 = vector.load %arg9[%c0_129, %c0_130] : memref<32x256xf32, #tpu.memory_space<vmem>>, vector<32x256xf32>
    %cst_131 = arith.constant dense<0.000000e+00> : vector<64x256xf32>
    %377 = tpu.matmul %375, %376, %cst_131 {dimension_numbers = #tpu.dot_dimension_numbers<[1], [0], [0], [1], [0, 0, 1, 1], [], []>} : vector<64x32xf32>, vector<32x256xf32>, vector<64x256xf32> -> vector<64x256xf32>
    %c0_132 = arith.constant 0 : index
    %c0_133 = arith.constant 0 : index
    %378 = vector.load %arg10[%c0_132, %c0_133] : memref<1x256xf32, #tpu.memory_space<vmem>>, vector<1x256xf32>
    %379 = vector.broadcast %378 : vector<1x256xf32> to vector<64x256xf32>
    %380 = arith.addf %377, %379 : vector<64x256xf32>
    %cst_134 = arith.constant 0.000000e+00 : f32
    %381 = vector.broadcast %cst_134 : f32 to vector<64x256xf32>
    %382 = arith.maximumf %380, %381 : vector<64x256xf32>
    %383 = vector.extract_strided_slice %382 {offsets = [0, 0], sizes = [64, 128], strides = [1, 1]} : vector<64x256xf32> to vector<64x128xf32>
    %384 = vector.extract_strided_slice %382 {offsets = [0, 128], sizes = [64, 128], strides = [1, 1]} : vector<64x256xf32> to vector<64x128xf32>
    %c0_135 = arith.constant 0 : index
    %c0_136 = arith.constant 0 : index
    %385 = vector.load %arg11[%c0_135, %c0_136] : memref<128x32xf32, #tpu.memory_space<vmem>>, vector<128x32xf32>
    %cst_137 = arith.constant dense<0.000000e+00> : vector<64x32xf32>
    %386 = tpu.matmul %383, %385, %cst_137 {dimension_numbers = #tpu.dot_dimension_numbers<[1], [0], [0], [1], [0, 0, 1, 1], [], []>} : vector<64x128xf32>, vector<128x32xf32>, vector<64x32xf32> -> vector<64x32xf32>
    %c0_138 = arith.constant 0 : index
    %c0_139 = arith.constant 0 : index
    %387 = vector.load %arg12[%c0_138, %c0_139] : memref<1x32xf32, #tpu.memory_space<vmem>>, vector<1x32xf32>
    %388 = vector.broadcast %387 : vector<1x32xf32> to vector<64x32xf32>
    %389 = arith.addf %386, %388 : vector<64x32xf32>
    %c0_140 = arith.constant 0 : index
    %c0_141 = arith.constant 0 : index
    %390 = vector.load %arg15[%c0_140, %c0_141] : memref<64x32xf32, #tpu.memory_space<vmem>>, vector<64x32xf32>
    tpu.vector_store %arg15[%c0_140, %c0_141], %389 {strides = array<i32>} : memref<64x32xf32, #tpu.memory_space<vmem>>, vector<64x32xf32>,
    %c0_142 = arith.constant 0 : index
    %c0_143 = arith.constant 0 : index
    %391 = vector.load %arg13[%c0_142, %c0_143] : memref<128x1xf32, #tpu.memory_space<vmem>>, vector<128x1xf32>
    %cst_144 = arith.constant dense<0.000000e+00> : vector<64x1xf32>
    %392 = tpu.matmul %384, %391, %cst_144 {dimension_numbers = #tpu.dot_dimension_numbers<[1], [0], [0], [1], [0, 0, 1, 1], [], []>} : vector<64x128xf32>, vector<128x1xf32>, vector<64x1xf32> -> vector<64x1xf32>
    %c0_145 = arith.constant 0 : index
    %c0_146 = arith.constant 0 : index
    %393 = vector.load %arg14[%c0_145, %c0_146] : memref<1x1xf32, #tpu.memory_space<vmem>>, vector<1x1xf32>
    %394 = vector.broadcast %393 : vector<1x1xf32> to vector<64x1xf32>
    %395 = arith.addf %392, %394 : vector<64x1xf32>
    %c0_147 = arith.constant 0 : index
    %c0_148 = arith.constant 0 : index
    %396 = vector.load %arg16[%c0_147, %c0_148] : memref<64x1xf32, #tpu.memory_space<vmem>>, vector<64x1xf32>
    tpu.vector_store %arg16[%c0_147, %c0_148], %395 {strides = array<i32>} : memref<64x1xf32, #tpu.memory_space<vmem>>, vector<64x1xf32>,
    return
  }
}

</mosaic_0001>

<llo_original>
// kernel: tpu_custom_call.1
$region0: #{tpu_custom_call.1}
  #allocation0 [shape = 'u32[]', space=smem, size = 0x4, offset = 0x4, fixed_abs, tag = 'smem constant byte address 0x4 - core index']
  #allocation1 [shape = 'u32[144,128]{1,0:T(1,128)}', space=vmem, size = 0x12000, scoped, tag = 'internal scratch']
  #allocation2 [shape = 'f32[64,96]{1,0:T(8,128)}', space=vmem, size = 0x8000, scoped, tag = 'scratch operand']
  #allocation3 [shape = 'f32[64,32]{1,0:T(8,128)}', space=vmem, size = 0x8000, scoped, tag = 'scratch operand']
  #allocation4 [shape = 'f32[1,1]{1,0:T(1,128)S(1)}', space=vmem, size = 0x200, scoped, tag = 'scoped memory for tpu_custom_call.1']
  %s0 = inlined_call_operand.vmem [shape: f32[64,16], index: 0, kind: input, shape index: {}]
  %s1 = inlined_call_operand.vmem [shape: f32[64,1], index: 1, kind: input, shape index: {}]
  %s2 = inlined_call_operand.vmem [shape: f32[8,32], index: 2, kind: input, shape index: {}]
  %s3 = inlined_call_operand.vmem [shape: f32[16,32], index: 3, kind: input, shape index: {}]
  %s4 = inlined_call_operand.vmem [shape: f32[1,32], index: 4, kind: input, shape index: {}]
  %s5 = inlined_call_operand.vmem [shape: f32[32,96], index: 5, kind: input, shape index: {}]
  %s6 = inlined_call_operand.vmem [shape: f32[1,96], index: 6, kind: input, shape index: {}]
  %s7 = inlined_call_operand.vmem [shape: f32[32,96], index: 7, kind: input, shape index: {}]
  %s8 = inlined_call_operand.vmem [shape: f32[1,32], index: 8, kind: input, shape index: {}]
  %s9 = inlined_call_operand.vmem [shape: f32[32,256], index: 9, kind: input, shape index: {}]
  %s10 = inlined_call_operand.vmem [shape: f32[1,256], index: 10, kind: input, shape index: {}]
  %s11 = inlined_call_operand.vmem [shape: f32[128,32], index: 11, kind: input, shape index: {}]
  %s12 = inlined_call_operand.vmem [shape: f32[1,32], index: 12, kind: input, shape index: {}]
  %s13 = inlined_call_operand.vmem [shape: f32[128,1], index: 13, kind: input, shape index: {}]
  %s14 = inlined_call_operand.<no memory space> [shape: f32[1,1], index: 14, kind: input, shape index: {}]
  %s15 = inlined_call_operand.vmem [shape: f32[64,32], index: 15, kind: output, shape index: {0}]
  %s16 = inlined_call_operand.vmem [shape: f32[64,1], index: 16, kind: output, shape index: {1}]
  %17 = xla_tuple %s15, %s16
  %s18 = sld [smem:[#allocation0]]
  $region78: #{tpu_custom_call.1} parent=0
    _
  %s20 = ssub.s32 1, %s18
  %s21 = scalar_select 0, %s20, %s18
  %v22 = vstv %s14
  %23 = vst [vmem:[#allocation4] sm:$0x1] %v22
  // Predicated region
  $region2: #{tpu_custom_call.1} parent=0 // pred_check
    _
  $region3: #{tpu_custom_call.1} parent=0 // pred_check_branch
    %25 = sbr.rel (0) target = $region5
  $region4: #{tpu_custom_call.1} parent=0 // pred_region
    _
  $region5: #{tpu_custom_call.1} parent=0 // pred_fallthru
    _
  // Predicated region
  $region6: #{tpu_custom_call.1} parent=0 // pred_check
    _
  $region7: #{tpu_custom_call.1} parent=0 // pred_check_branch
    %27 = sbr.rel (0) target = $region9
  $region8: #{tpu_custom_call.1} parent=0 // pred_region
    _
  $region9: #{tpu_custom_call.1} parent=0 // pred_fallthru
    _
  // Predicated region
  $region10: #{tpu_custom_call.1} parent=0 // pred_check
    _
  $region11: #{tpu_custom_call.1} parent=0 // pred_check_branch
    %29 = sbr.rel (0) target = $region13
  $region12: #{tpu_custom_call.1} parent=0 // pred_region
    _
  $region13: #{tpu_custom_call.1} parent=0 // pred_fallthru
    _
  // Predicated region
  $region14: #{tpu_custom_call.1} parent=0 // pred_check
    _
  $region15: #{tpu_custom_call.1} parent=0 // pred_check_branch
    %31 = sbr.rel (0) target = $region17
  $region16: #{tpu_custom_call.1} parent=0 // pred_region
    _
  $region17: #{tpu_custom_call.1} parent=0 // pred_fallthru
    _
  // Predicated region
  $region18: #{tpu_custom_call.1} parent=0 // pred_check
    _
  $region19: #{tpu_custom_call.1} parent=0 // pred_check_branch
    %33 = sbr.rel (0) target = $region21
  $region20: #{tpu_custom_call.1} parent=0 // pred_region
    _
  $region21: #{tpu_custom_call.1} parent=0 // pred_fallthru
    _
  // Predicated region
  $region22: #{tpu_custom_call.1} parent=0 // pred_check
    _
  $region23: #{tpu_custom_call.1} parent=0 // pred_check_branch
    %35 = sbr.rel (0) target = $region25
  $region24: #{tpu_custom_call.1} parent=0 // pred_region
    _
  $region25: #{tpu_custom_call.1} parent=0 // pred_fallthru
    _
  // Predicated region
  $region26: #{tpu_custom_call.1} parent=0 // pred_check
    _
  $region27: #{tpu_custom_call.1} parent=0 // pred_check_branch
    %37 = sbr.rel (0) target = $region29
  $region28: #{tpu_custom_call.1} parent=0 // pred_region
    _
  $region29: #{tpu_custom_call.1} parent=0 // pred_fallthru
    _
  // Predicated region
  $region30: #{tpu_custom_call.1} parent=0 // pred_check
    _
  $region31: #{tpu_custom_call.1} parent=0 // pred_check_branch
    %39 = sbr.rel (0) target = $region33
  $region32: #{tpu_custom_call.1} parent=0 // pred_region
    _
  $region33: #{tpu_custom_call.1} parent=0 // pred_fallthru
    _
  // Predicated region
  $region34: #{tpu_custom_call.1} parent=0 // pred_check
    _
  $region35: #{tpu_custom_call.1} parent=0 // pred_check_branch
    %41 = sbr.rel (0) target = $region37
  $region36: #{tpu_custom_call.1} parent=0 // pred_region
    _
  $region37: #{tpu_custom_call.1} parent=0 // pred_fallthru
    _
  // Predicated region
  $region38: #{tpu_custom_call.1} parent=0 // pred_check
    _
  $region39: #{tpu_custom_call.1} parent=0 // pred_check_branch
    %43 = sbr.rel (0) target = $region41
  $region40: #{tpu_custom_call.1} parent=0 // pred_region
    _
  $region41: #{tpu_custom_call.1} parent=0 // pred_fallthru
    _
  // Predicated region
  $region42: #{tpu_custom_call.1} parent=0 // pred_check
    _
  $region43: #{tpu_custom_call.1} parent=0 // pred_check_branch
    %45 = sbr.rel (0) target = $region45
  $region44: #{tpu_custom_call.1} parent=0 // pred_region
    _
  $region45: #{tpu_custom_call.1} parent=0 // pred_fallthru
    _
  // Predicated region
  $region46: #{tpu_custom_call.1} parent=0 // pred_check
    _
  $region47: #{tpu_custom_call.1} parent=0 // pred_check_branch
    %47 = sbr.rel (0) target = $region49
  $region48: #{tpu_custom_call.1} parent=0 // pred_region
    _
  $region49: #{tpu_custom_call.1} parent=0 // pred_fallthru
    _
  // Predicated region
  $region50: #{tpu_custom_call.1} parent=0 // pred_check
    _
  $region51: #{tpu_custom_call.1} parent=0 // pred_check_branch
    %49 = sbr.rel (0) target = $region53
  $region52: #{tpu_custom_call.1} parent=0 // pred_region
    _
  $region53: #{tpu_custom_call.1} parent=0 // pred_fallthru
    _
  // Predicated region
  $region54: #{tpu_custom_call.1} parent=0 // pred_check
    _
  $region55: #{tpu_custom_call.1} parent=0 // pred_check_branch
    %51 = sbr.rel (0) target = $region57
  $region56: #{tpu_custom_call.1} parent=0 // pred_region
    _
  $region57: #{tpu_custom_call.1} parent=0 // pred_fallthru
    _
  // Predicated region
  $region58: #{tpu_custom_call.1} parent=0 // pred_check
    _
  $region59: #{tpu_custom_call.1} parent=0 // pred_check_branch
    %53 = sbr.rel (0) target = $region61
  $region60: #{tpu_custom_call.1} parent=0 // pred_region
    _
  $region61: #{tpu_custom_call.1} parent=0 // pred_fallthru
    _
  %v54 = vld [vmem:[%s0] sm:$0xff]
  %v55 = vld [vmem:[%s0 + $0x8] sm:$0xff]
  %v56 = vld [vmem:[%s0 + $0x10] sm:$0xff]
  %v57 = vld [vmem:[%s0 + $0x18] sm:$0xff]
  %v58 = vld [vmem:[%s0 + $0x20] sm:$0xff]
  %v59 = vld [vmem:[%s0 + $0x28] sm:$0xff]
  %v60 = vld [vmem:[%s0 + $0x30] sm:$0xff]
  %v61 = vld [vmem:[%s0 + $0x38] sm:$0xff]
  %v62 = vld [vmem:[%s3] sm:$0xff]
  %v63 = vld [vmem:[%s3 + $0x8] sm:$0xff]
  %v64 = vld [vmem:[%s4] sm:$0x1]
  %v66 = vlaneseq
  %v67 = vshrl.u32 %v66, 7
  %v68 = vsub.s32 0, %v67
  %v69 = vrot.slane %v64, %v68
  %vm71 = vcmask 130048
  %v73 = vsel %vm71, %v54, 0
  %v76 = vsel %vm71, %v55, 0
  %v79 = vsel %vm71, %v56, 0
  %v82 = vsel %vm71, %v57, 0
  %v85 = vsel %vm71, %v58, 0
  %v88 = vsel %vm71, %v59, 0
  %v91 = vsel %vm71, %v60, 0
  %v94 = vsel %vm71, %v61, 0
  %96 = vmatprep.subr.mxu0 0.0
  %97 = vmatpush1.msra.mxu0 %v62
  %98 = vmatprep.subr.mxu0 0.0
  %99 = vmatpush1.msra.mxu0 %v63
  %100 = vmatprep.subr.mxu0 0.0
  %101 = vmatpush1.msra.mxu0 0.0
  %102 = vmatprep.subr.mxu0 0.0
  %103 = vmatpush1.msra.mxu0 0.0
  %104 = vmatprep.subr.mxu0 0.0
  %105 = vmatpush1.msra.mxu0 0.0
  %106 = vmatprep.subr.mxu0 0.0
  %107 = vmatpush1.msra.mxu0 0.0
  %108 = vmatprep.subr.mxu0 0.0
  %109 = vmatpush1.msra.mxu0 0.0
  %110 = vmatprep.subr.mxu0 0.0
  %111 = vmatpush1.msra.mxu0 0.0
  %112 = vmatprep.subr.mxu0 0.0
  %113 = vmatpush1.msra.mxu0 0.0
  %114 = vmatprep.subr.mxu0 0.0
  %115 = vmatpush1.msra.mxu0 0.0
  %116 = vmatprep.subr.mxu0 0.0
  %117 = vmatpush1.msra.mxu0 0.0
  %118 = vmatprep.subr.mxu0 0.0
  %119 = vmatpush1.msra.mxu0 0.0
  %120 = vmatprep.subr.mxu0 0.0
  %121 = vmatpush1.msra.mxu0 0.0
  %122 = vmatprep.subr.mxu0 0.0
  %123 = vmatpush1.msra.mxu0 0.0
  %124 = vmatprep.subr.mxu0 0.0
  %125 = vmatpush1.msra.mxu0 0.0
  %126 = vmatprep.subr.mxu0 0.0
  %127 = vmatpush1.msra.mxu0 0.0
  %128 = vmatprep.subr.mxu0 0.0
  %129 = vmatpush1.msra.mxu0 0.0
  %130 = vmatprep.subr.mxu0 0.0
  %131 = vmatpush1.msra.mxu0 0.0
  %132 = vmatprep.subr.mxu0 0.0
  %133 = vmatpush1.msra.mxu0 0.0
  %134 = vmatprep.subr.mxu0 0.0
  %135 = vmatpush1.msra.mxu0 0.0
  %136 = vmatprep.subr.mxu0 0.0
  %137 = vmatpush1.msra.mxu0 0.0
  %138 = vmatprep.subr.mxu0 0.0
  %139 = vmatpush1.msra.mxu0 0.0
  %140 = vmatprep.subr.mxu0 0.0
  %141 = vmatpush1.msra.mxu0 0.0
  %142 = vmatprep.subr.mxu0 0.0
  %143 = vmatpush1.msra.mxu0 0.0
  %144 = vmatprep.subr.mxu0 0.0
  %145 = vmatpush1.msra.mxu0 0.0
  %146 = vmatprep.subr.mxu0 0.0
  %147 = vmatpush1.msra.mxu0 0.0
  %148 = vmatprep.subr.mxu0 0.0
  %149 = vmatpush1.msra.mxu0 0.0
  %150 = vmatprep.subr.mxu0 0.0
  %151 = vmatpush1.msra.mxu0 0.0
  %152 = vmatprep.subr.mxu0 0.0
  %153 = vmatpush1.msra.mxu0 0.0
  %154 = vmatprep.subr.mxu0 0.0
  %155 = vmatpush1.msra.mxu0 0.0
  %156 = vmatprep.subr.mxu0 0.0
  %157 = vmatpush1.msra.mxu0 0.0
  %158 = vmatprep.subr.mxu0 0.0
  %159 = vmatpush1.msra.mxu0 0.0
  %160 = vmatprep.mubr.f32.mxu0 0.0
  %161 = vmatmul.mubr.f32.gmra.mrb[0].mxu0 %v73
  %v162 = vpop.f32.mrb[0].mxu0
  %v163 = vadd.f32 %v69, %v162
  %v164 = vpop.f32.mrb[0].mxu0
  %165 = vmatprep.mubr.f32.mxu0 0.0
  %166 = vmatmul.mubr.f32.gmra.mrb[0].mxu0 %v76
  %v167 = vpop.f32.mrb[0].mxu0
  %v168 = vadd.f32 %v69, %v167
  %v169 = vpop.f32.mrb[0].mxu0
  %170 = vmatprep.mubr.f32.mxu0 0.0
  %171 = vmatmul.mubr.f32.gmra.mrb[0].mxu0 %v79
  %v172 = vpop.f32.mrb[0].mxu0
  %v173 = vadd.f32 %v69, %v172
  %v174 = vpop.f32.mrb[0].mxu0
  %175 = vmatprep.mubr.f32.mxu0 0.0
  %176 = vmatmul.mubr.f32.gmra.mrb[0].mxu0 %v82
  %v177 = vpop.f32.mrb[0].mxu0
  %v178 = vadd.f32 %v69, %v177
  %v179 = vpop.f32.mrb[0].mxu0
  %180 = vmatprep.mubr.f32.mxu0 0.0
  %181 = vmatmul.mubr.f32.gmra.mrb[0].mxu0 %v85
  %v182 = vpop.f32.mrb[0].mxu0
  %v183 = vadd.f32 %v69, %v182
  %v184 = vpop.f32.mrb[0].mxu0
  %185 = vmatprep.mubr.f32.mxu0 0.0
  %186 = vmatmul.mubr.f32.gmra.mrb[0].mxu0 %v88
  %v187 = vpop.f32.mrb[0].mxu0
  %v188 = vadd.f32 %v69, %v187
  %v189 = vpop.f32.mrb[0].mxu0
  %190 = vmatprep.mubr.f32.mxu0 0.0
  %191 = vmatmul.mubr.f32.gmra.mrb[0].mxu0 %v91
  %v192 = vpop.f32.mrb[0].mxu0
  %v193 = vadd.f32 %v69, %v192
  %v194 = vpop.f32.mrb[0].mxu0
  %195 = vmatprep.mubr.f32.mxu0 0.0
  %196 = vmatmul.mubr.f32.gmra.mrb[0].mxu0 %v94
  %v197 = vpop.f32.mrb[0].mxu0
  %v198 = vadd.f32 %v69, %v197
  %v199 = vpop.f32.mrb[0].mxu0
  %200 = vdwg.mxu0
  %v201 = vmax.f32 %v163, 0.0
  %v202 = vmax.f32 %v168, 0.0
  %v203 = vmax.f32 %v173, 0.0
  %v204 = vmax.f32 %v178, 0.0
  %v205 = vmax.f32 %v183, 0.0
  %v206 = vmax.f32 %v188, 0.0
  %v207 = vmax.f32 %v193, 0.0
  %v208 = vmax.f32 %v198, 0.0
  %v209 = vld [vmem:[%s5] sm:$0xff]
  %v210 = vld [vmem:[%s5 + $0x8] sm:$0xff]
  %v211 = vld [vmem:[%s5 + $0x10] sm:$0xff]
  %v212 = vld [vmem:[%s5 + $0x18] sm:$0xff]
  %v213 = vld [vmem:[%s6] sm:$0x1]
  %v215 = vlaneseq
  %v216 = vshrl.u32 %v215, 7
  %v217 = vsub.s32 0, %v216
  %v218 = vrot.slane %v213, %v217
  %vm220 = vcmask 261120
  %v222 = vsel %vm220, %v201, 0
  %v225 = vsel %vm220, %v202, 0
  %v228 = vsel %vm220, %v203, 0
  %v231 = vsel %vm220, %v204, 0
  %v234 = vsel %vm220, %v205, 0
  %v237 = vsel %vm220, %v206, 0
  %v240 = vsel %vm220, %v207, 0
  %v243 = vsel %vm220, %v208, 0
  %245 = vmatprep.subr.mxu0 0.0
  %246 = vmatpush1.msra.mxu0 %v209
  %247 = vmatprep.subr.mxu0 0.0
  %248 = vmatpush1.msra.mxu0 %v210
  %249 = vmatprep.subr.mxu0 0.0
  %250 = vmatpush1.msra.mxu0 %v211
  %251 = vmatprep.subr.mxu0 0.0
  %252 = vmatpush1.msra.mxu0 %v212
  %253 = vmatprep.subr.mxu0 0.0
  %254 = vmatpush1.msra.mxu0 0.0
  %255 = vmatprep.subr.mxu0 0.0
  %256 = vmatpush1.msra.mxu0 0.0
  %257 = vmatprep.subr.mxu0 0.0
  %258 = vmatpush1.msra.mxu0 0.0
  %259 = vmatprep.subr.mxu0 0.0
  %260 = vmatpush1.msra.mxu0 0.0
  %261 = vmatprep.subr.mxu0 0.0
  %262 = vmatpush1.msra.mxu0 0.0
  %263 = vmatprep.subr.mxu0 0.0
  %264 = vmatpush1.msra.mxu0 0.0
  %265 = vmatprep.subr.mxu0 0.0
  %266 = vmatpush1.msra.mxu0 0.0
  %267 = vmatprep.subr.mxu0 0.0
  %268 = vmatpush1.msra.mxu0 0.0
  %269 = vmatprep.subr.mxu0 0.0
  %270 = vmatpush1.msra.mxu0 0.0
  %271 = vmatprep.subr.mxu0 0.0
  %272 = vmatpush1.msra.mxu0 0.0
  %273 = vmatprep.subr.mxu0 0.0
  %274 = vmatpush1.msra.mxu0 0.0
  %275 = vmatprep.subr.mxu0 0.0
  %276 = vmatpush1.msra.mxu0 0.0
  %277 = vmatprep.subr.mxu0 0.0
  %278 = vmatpush1.msra.mxu0 0.0
  %279 = vmatprep.subr.mxu0 0.0
  %280 = vmatpush1.msra.mxu0 0.0
  %281 = vmatprep.subr.mxu0 0.0
  %282 = vmatpush1.msra.mxu0 0.0
  %283 = vmatprep.subr.mxu0 0.0
  %284 = vmatpush1.msra.mxu0 0.0
  %285 = vmatprep.subr.mxu0 0.0
  %286 = vmatpush1.msra.mxu0 0.0
  %287 = vmatprep.subr.mxu0 0.0
  %288 = vmatpush1.msra.mxu0 0.0
  %289 = vmatprep.subr.mxu0 0.0
  %290 = vmatpush1.msra.mxu0 0.0
  %291 = vmatprep.subr.mxu0 0.0
  %292 = vmatpush1.msra.mxu0 0.0
  %293 = vmatprep.subr.mxu0 0.0
  %294 = vmatpush1.msra.mxu0 0.0
  %295 = vmatprep.subr.mxu0 0.0
  %296 = vmatpush1.msra.mxu0 0.0
  %297 = vmatprep.subr.mxu0 0.0
  %298 = vmatpush1.msra.mxu0 0.0
  %299 = vmatprep.subr.mxu0 0.0
  %300 = vmatpush1.msra.mxu0 0.0
  %301 = vmatprep.subr.mxu0 0.0
  %302 = vmatpush1.msra.mxu0 0.0
  %303 = vmatprep.subr.mxu0 0.0
  %304 = vmatpush1.msra.mxu0 0.0
  %305 = vmatprep.subr.mxu0 0.0
  %306 = vmatpush1.msra.mxu0 0.0
  %307 = vmatprep.subr.mxu0 0.0
  %308 = vmatpush1.msra.mxu0 0.0
  %309 = vmatprep.mubr.f32.mxu0 0.0
  %310 = vmatmul.mubr.f32.gmra.mrb[0].mxu0 %v222
  %v311 = vpop.f32.mrb[0].mxu0
  %v312 = vadd.f32 %v218, %v311
  %v313 = vpop.f32.mrb[0].mxu0
  %314 = vmatprep.mubr.f32.mxu0 0.0
  %315 = vmatmul.mubr.f32.gmra.mrb[0].mxu0 %v225
  %v316 = vpop.f32.mrb[0].mxu0
  %v317 = vadd.f32 %v218, %v316
  %v318 = vpop.f32.mrb[0].mxu0
  %319 = vmatprep.mubr.f32.mxu0 0.0
  %320 = vmatmul.mubr.f32.gmra.mrb[0].mxu0 %v228
  %v321 = vpop.f32.mrb[0].mxu0
  %v322 = vadd.f32 %v218, %v321
  %v323 = vpop.f32.mrb[0].mxu0
  %324 = vmatprep.mubr.f32.mxu0 0.0
  %325 = vmatmul.mubr.f32.gmra.mrb[0].mxu0 %v231
  %v326 = vpop.f32.mrb[0].mxu0
  %v327 = vadd.f32 %v218, %v326
  %v328 = vpop.f32.mrb[0].mxu0
  %329 = vmatprep.mubr.f32.mxu0 0.0
  %330 = vmatmul.mubr.f32.gmra.mrb[0].mxu0 %v234
  %v331 = vpop.f32.mrb[0].mxu0
  %v332 = vadd.f32 %v218, %v331
  %v333 = vpop.f32.mrb[0].mxu0
  %334 = vmatprep.mubr.f32.mxu0 0.0
  %335 = vmatmul.mubr.f32.gmra.mrb[0].mxu0 %v237
  %v336 = vpop.f32.mrb[0].mxu0
  %v337 = vadd.f32 %v218, %v336
  %v338 = vpop.f32.mrb[0].mxu0
  %339 = vmatprep.mubr.f32.mxu0 0.0
  %340 = vmatmul.mubr.f32.gmra.mrb[0].mxu0 %v240
  %v341 = vpop.f32.mrb[0].mxu0
  %v342 = vadd.f32 %v218, %v341
  %v343 = vpop.f32.mrb[0].mxu0
  %344 = vmatprep.mubr.f32.mxu0 0.0
  %345 = vmatmul.mubr.f32.gmra.mrb[0].mxu0 %v243
  %v346 = vpop.f32.mrb[0].mxu0
  %v347 = vadd.f32 %v218, %v346
  %v348 = vpop.f32.mrb[0].mxu0
  %349 = vdwg.mxu0
  %vm350 = vcmask 785408
  %351 = vst.msk [vmem:[#allocation2] sm:$0xff] %vm350, %v312
  %352 = vst.msk [vmem:[#allocation2 + $0x8] sm:$0xff] %vm350, %v317
  %353 = vst.msk [vmem:[#allocation2 + $0x10] sm:$0xff] %vm350, %v322
  %354 = vst.msk [vmem:[#allocation2 + $0x18] sm:$0xff] %vm350, %v327
  %355 = vst.msk [vmem:[#allocation2 + $0x20] sm:$0xff] %vm350, %v332
  %356 = vst.msk [vmem:[#allocation2 + $0x28] sm:$0xff] %vm350, %v337
  %357 = vst.msk [vmem:[#allocation2 + $0x30] sm:$0xff] %vm350, %v342
  %358 = vst.msk [vmem:[#allocation2 + $0x38] sm:$0xff] %vm350, %v347
  %v359 = vld [vmem:[%s2] sm:$0xff]
  %v360 = vld [vmem:[%s1] sm:$0xff]
  %vm361 = vcmp.ne.f32.partialorder %v360, 0.0
  %v362 = vsel %vm361, 1, 0
  %363 = vset.pattern.permute.xlu0 0
  %364 = vperm.xlu0 %363, %v362
  %v365 = vpop.permute.xlu0 %364
  %vm366 = vcmp.eq.s32.totalorder %v365, 1
  %v367 = vsel %vm366, 0.0, %v359
  %v368 = vld [vmem:[#allocation2] sm:$0xff]
  %v369 = vld [vmem:[%s7] sm:$0xff]
  %v370 = vld [vmem:[%s7 + $0x8] sm:$0xff]
  %v371 = vld [vmem:[%s7 + $0x10] sm:$0xff]
  %v372 = vld [vmem:[%s7 + $0x18] sm:$0xff]
  %v374 = vsel %vm220, %v367, 0
  %376 = vmatprep.subr.mxu0 0.0
  %377 = vmatpush1.msra.mxu0 %v369
  %378 = vmatprep.subr.mxu0 0.0
  %379 = vmatpush1.msra.mxu0 %v370
  %380 = vmatprep.subr.mxu0 0.0
  %381 = vmatpush1.msra.mxu0 %v371
  %382 = vmatprep.subr.mxu0 0.0
  %383 = vmatpush1.msra.mxu0 %v372
  %384 = vmatprep.subr.mxu0 0.0
  %385 = vmatpush1.msra.mxu0 0.0
  %386 = vmatprep.subr.mxu0 0.0
  %387 = vmatpush1.msra.mxu0 0.0
  %388 = vmatprep.subr.mxu0 0.0
  %389 = vmatpush1.msra.mxu0 0.0
  %390 = vmatprep.subr.mxu0 0.0
  %391 = vmatpush1.msra.mxu0 0.0
  %392 = vmatprep.subr.mxu0 0.0
  %393 = vmatpush1.msra.mxu0 0.0
  %394 = vmatprep.subr.mxu0 0.0
  %395 = vmatpush1.msra.mxu0 0.0
  %396 = vmatprep.subr.mxu0 0.0
  %397 = vmatpush1.msra.mxu0 0.0
  %398 = vmatprep.subr.mxu0 0.0
  %399 = vmatpush1.msra.mxu0 0.0
  %400 = vmatprep.subr.mxu0 0.0
  %401 = vmatpush1.msra.mxu0 0.0
  %402 = vmatprep.subr.mxu0 0.0
  %403 = vmatpush1.msra.mxu0 0.0
  %404 = vmatprep.subr.mxu0 0.0
  %405 = vmatpush1.msra.mxu0 0.0
  %406 = vmatprep.subr.mxu0 0.0
  %407 = vmatpush1.msra.mxu0 0.0
  %408 = vmatprep.subr.mxu0 0.0
  %409 = vmatpush1.msra.mxu0 0.0
  %410 = vmatprep.subr.mxu0 0.0
  %411 = vmatpush1.msra.mxu0 0.0
  %412 = vmatprep.subr.mxu0 0.0
  %413 = vmatpush1.msra.mxu0 0.0
  %414 = vmatprep.subr.mxu0 0.0
  %415 = vmatpush1.msra.mxu0 0.0
  %416 = vmatprep.subr.mxu0 0.0
  %417 = vmatpush1.msra.mxu0 0.0
  %418 = vmatprep.subr.mxu0 0.0
  %419 = vmatpush1.msra.mxu0 0.0
  %420 = vmatprep.subr.mxu0 0.0
  %421 = vmatpush1.msra.mxu0 0.0
  %422 = vmatprep.subr.mxu0 0.0
  %423 = vmatpush1.msra.mxu0 0.0
  %424 = vmatprep.subr.mxu0 0.0
  %425 = vmatpush1.msra.mxu0 0.0
  %426 = vmatprep.subr.mxu0 0.0
  %427 = vmatpush1.msra.mxu0 0.0
  %428 = vmatprep.subr.mxu0 0.0
  %429 = vmatpush1.msra.mxu0 0.0
  %430 = vmatprep.subr.mxu0 0.0
  %431 = vmatpush1.msra.mxu0 0.0
  %432 = vmatprep.subr.mxu0 0.0
  %433 = vmatpush1.msra.mxu0 0.0
  %434 = vmatprep.subr.mxu0 0.0
  %435 = vmatpush1.msra.mxu0 0.0
  %436 = vmatprep.subr.mxu0 0.0
  %437 = vmatpush1.msra.mxu0 0.0
  %438 = vmatprep.subr.mxu0 0.0
  %439 = vmatpush1.msra.mxu0 0.0
  %440 = vmatprep.mubr.f32.mxu0 0.0
  %441 = vmatmul.mubr.f32.gmra.mrb[0].mxu0 %v374
  %v442 = vpop.f32.mrb[0].mxu0
  %v443 = vadd.f32 0.0, %v442
  %v444 = vpop.f32.mrb[0].mxu0
  %445 = vdwg.mxu0
  %v446 = vadd.f32 %v368, %v443
  %v447 = vxor.u32 %v446, 2147483648
  %v448 = vmul.f32 %v447, 1.442695
  %v449 = vpow.pop %v448
  %v450 = vadd.f32 %v449, 1.0
  %v451 = vrcp.pop %v450
  %v452 = vmul.f32 1.0, %v451
  %v453 = vld [vmem:[%s8] sm:$0x1]
  %v455 = vlaneseq
  %v456 = vshrl.u32 %v455, 7
  %v457 = vsub.s32 0, %v456
  %v458 = vrot.slane %v453, %v457
  %459 = vrot.lane.b32.xlu0 %v458, 64
  %v460 = vpop.permute.xlu0 %459
  %v462 = vadd.f32 %v443, %v460
  %464 = vrot.lane.b32.xlu0 %v462, 64
  %v465 = vpop.permute.xlu0 %464
  %v467 = vmul.f32 %v452, %v465
  %469 = vrot.lane.b32.xlu0 %v467, 64
  %v470 = vpop.permute.xlu0 %469
  %v472 = vadd.f32 %v368, %v470
  %v473 = vtanh.pop %v472
  %v474 = vsub.f32 1.0, %v452
  %476 = vrot.lane.b32.xlu0 %v473, 96
  %v477 = vpop.permute.xlu0 %476
  %v479 = vmul.f32 %v474, %v477
  %480 = vrot.lane.b32.xlu0 %v367, 32
  %v481 = vpop.permute.xlu0 %480
  %v483 = vmul.f32 %v452, %v481
  %v484 = vadd.f32 %v479, %v483
  %486 = vrot.lane.b32.xlu0 %v484, 96
  %v487 = vpop.permute.xlu0 %486
  %489 = vst.msk [vmem:[#allocation3] sm:$0xff] %vm220, %v487
  %s490 = scalar_lea.vmem %s1, 8
  %v491 = vld [vmem:[%s490] sm:$0xff]
  %vm492 = vcmp.ne.f32.partialorder %v491, 0.0
  %v493 = vsel %vm492, 1, 0
  %494 = vset.pattern.permute.xlu0 0
  %495 = vperm.xlu0 %494, %v493
  %v496 = vpop.permute.xlu0 %495
  %vm497 = vcmp.eq.s32.totalorder %v496, 1
  %v498 = vsel %vm497, 0.0, %v484
  %s499 = scalar_lea.vmem [#allocation2], 8
  %v500 = vld [vmem:[%s499] sm:$0xff]
  %v501 = vld [vmem:[%s7] sm:$0xff]
  %v502 = vld [vmem:[%s7 + $0x8] sm:$0xff]
  %v503 = vld [vmem:[%s7 + $0x10] sm:$0xff]
  %v504 = vld [vmem:[%s7 + $0x18] sm:$0xff]
  %506 = vrot.lane.b32.xlu0 %v498, 96
  %v507 = vpop.permute.xlu0 %506
  %v508 = vsel %vm220, %v507, 0
  %510 = vmatprep.subr.mxu0 0.0
  %511 = vmatpush1.msra.mxu0 %v501
  %512 = vmatprep.subr.mxu0 0.0
  %513 = vmatpush1.msra.mxu0 %v502
  %514 = vmatprep.subr.mxu0 0.0
  %515 = vmatpush1.msra.mxu0 %v503
  %516 = vmatprep.subr.mxu0 0.0
  %517 = vmatpush1.msra.mxu0 %v504
  %518 = vmatprep.subr.mxu0 0.0
  %519 = vmatpush1.msra.mxu0 0.0
  %520 = vmatprep.subr.mxu0 0.0
  %521 = vmatpush1.msra.mxu0 0.0
  %522 = vmatprep.subr.mxu0 0.0
  %523 = vmatpush1.msra.mxu0 0.0
  %524 = vmatprep.subr.mxu0 0.0
  %525 = vmatpush1.msra.mxu0 0.0
  %526 = vmatprep.subr.mxu0 0.0
  %527 = vmatpush1.msra.mxu0 0.0
  %528 = vmatprep.subr.mxu0 0.0
  %529 = vmatpush1.msra.mxu0 0.0
  %530 = vmatprep.subr.mxu0 0.0
  %531 = vmatpush1.msra.mxu0 0.0
  %532 = vmatprep.subr.mxu0 0.0
  %533 = vmatpush1.msra.mxu0 0.0
  %534 = vmatprep.subr.mxu0 0.0
  %535 = vmatpush1.msra.mxu0 0.0
  %536 = vmatprep.subr.mxu0 0.0
  %537 = vmatpush1.msra.mxu0 0.0
  %538 = vmatprep.subr.mxu0 0.0
  %539 = vmatpush1.msra.mxu0 0.0
  %540 = vmatprep.subr.mxu0 0.0
  %541 = vmatpush1.msra.mxu0 0.0
  %542 = vmatprep.subr.mxu0 0.0
  %543 = vmatpush1.msra.mxu0 0.0
  %544 = vmatprep.subr.mxu0 0.0
  %545 = vmatpush1.msra.mxu0 0.0
  %546 = vmatprep.subr.mxu0 0.0
  %547 = vmatpush1.msra.mxu0 0.0
  %548 = vmatprep.subr.mxu0 0.0
  %549 = vmatpush1.msra.mxu0 0.0
  %550 = vmatprep.subr.mxu0 0.0
  %551 = vmatpush1.msra.mxu0 0.0
  %552 = vmatprep.subr.mxu0 0.0
  %553 = vmatpush1.msra.mxu0 0.0
  %554 = vmatprep.subr.mxu0 0.0
  %555 = vmatpush1.msra.mxu0 0.0
  %556 = vmatprep.subr.mxu0 0.0
  %557 = vmatpush1.msra.mxu0 0.0
  %558 = vmatprep.subr.mxu0 0.0
  %559 = vmatpush1.msra.mxu0 0.0
  %560 = vmatprep.subr.mxu0 0.0
  %561 = vmatpush1.msra.mxu0 0.0
  %562 = vmatprep.subr.mxu0 0.0
  %563 = vmatpush1.msra.mxu0 0.0
  %564 = vmatprep.subr.mxu0 0.0
  %565 = vmatpush1.msra.mxu0 0.0
  %566 = vmatprep.subr.mxu0 0.0
  %567 = vmatpush1.msra.mxu0 0.0
  %568 = vmatprep.subr.mxu0 0.0
  %569 = vmatpush1.msra.mxu0 0.0
  %570 = vmatprep.subr.mxu0 0.0
  %571 = vmatpush1.msra.mxu0 0.0
  %572 = vmatprep.subr.mxu0 0.0
  %573 = vmatpush1.msra.mxu0 0.0
  %574 = vmatprep.mubr.f32.mxu0 0.0
  %575 = vmatmul.mubr.f32.gmra.mrb[0].mxu0 %v508
  %v576 = vpop.f32.mrb[0].mxu0
  %v577 = vadd.f32 0.0, %v576
  %v578 = vpop.f32.mrb[0].mxu0
  %579 = vdwg.mxu0
  %v580 = vadd.f32 %v500, %v577
  %v581 = vxor.u32 %v580, 2147483648
  %v582 = vmul.f32 %v581, 1.442695
  %v583 = vpow.pop %v582
  %v584 = vadd.f32 %v583, 1.0
  %v585 = vrcp.pop %v584
  %v586 = vmul.f32 1.0, %v585
  %v587 = vld [vmem:[%s8] sm:$0x1]
  %v589 = vlaneseq
  %v590 = vshrl.u32 %v589, 7
  %v591 = vsub.s32 0, %v590
  %v592 = vrot.slane %v587, %v591
  %593 = vrot.lane.b32.xlu0 %v592, 64
  %v594 = vpop.permute.xlu0 %593
  %v596 = vadd.f32 %v577, %v594
  %598 = vrot.lane.b32.xlu0 %v596, 64
  %v599 = vpop.permute.xlu0 %598
  %v601 = vmul.f32 %v586, %v599
  %603 = vrot.lane.b32.xlu0 %v601, 64
  %v604 = vpop.permute.xlu0 %603
  %v606 = vadd.f32 %v500, %v604
  %v607 = vtanh.pop %v606
  %v608 = vsub.f32 1.0, %v586
  %610 = vrot.lane.b32.xlu0 %v607, 96
  %v611 = vpop.permute.xlu0 %610
  %v613 = vmul.f32 %v608, %v611
  %v614 = vmul.f32 %v586, %v498
  %v615 = vadd.f32 %v613, %v614
  %617 = vrot.lane.b32.xlu0 %v615, 96
  %v618 = vpop.permute.xlu0 %617
  %s620 = scalar_lea.vmem [#allocation3], 8
  %621 = vst.msk [vmem:[%s620] sm:$0xff] %vm220, %v618
  %s622 = scalar_lea.vmem %s1, 16
  %v623 = vld [vmem:[%s622] sm:$0xff]
  %vm624 = vcmp.ne.f32.partialorder %v623, 0.0
  %v625 = vsel %vm624, 1, 0
  %626 = vset.pattern.permute.xlu0 0
  %627 = vperm.xlu0 %626, %v625
  %v628 = vpop.permute.xlu0 %627
  %vm629 = vcmp.eq.s32.totalorder %v628, 1
  %v630 = vsel %vm629, 0.0, %v615
  %s631 = scalar_lea.vmem [#allocation2], 16
  %v632 = vld [vmem:[%s631] sm:$0xff]
  %v633 = vld [vmem:[%s7] sm:$0xff]
  %v634 = vld [vmem:[%s7 + $0x8] sm:$0xff]
  %v635 = vld [vmem:[%s7 + $0x10] sm:$0xff]
  %v636 = vld [vmem:[%s7 + $0x18] sm:$0xff]
  %638 = vrot.lane.b32.xlu0 %v630, 96
  %v639 = vpop.permute.xlu0 %638
  %v640 = vsel %vm220, %v639, 0
  %642 = vmatprep.subr.mxu0 0.0
  %643 = vmatpush1.msra.mxu0 %v633
  %644 = vmatprep.subr.mxu0 0.0
  %645 = vmatpush1.msra.mxu0 %v634
  %646 = vmatprep.subr.mxu0 0.0
  %647 = vmatpush1.msra.mxu0 %v635
  %648 = vmatprep.subr.mxu0 0.0
  %649 = vmatpush1.msra.mxu0 %v636
  %650 = vmatprep.subr.mxu0 0.0
  %651 = vmatpush1.msra.mxu0 0.0
  %652 = vmatprep.subr.mxu0 0.0
  %653 = vmatpush1.msra.mxu0 0.0
  %654 = vmatprep.subr.mxu0 0.0
  %655 = vmatpush1.msra.mxu0 0.0
  %656 = vmatprep.subr.mxu0 0.0
  %657 = vmatpush1.msra.mxu0 0.0
  %658 = vmatprep.subr.mxu0 0.0
  %659 = vmatpush1.msra.mxu0 0.0
  %660 = vmatprep.subr.mxu0 0.0
  %661 = vmatpush1.msra.mxu0 0.0
  %662 = vmatprep.subr.mxu0 0.0
  %663 = vmatpush1.msra.mxu0 0.0
  %664 = vmatprep.subr.mxu0 0.0
  %665 = vmatpush1.msra.mxu0 0.0
  %666 = vmatprep.subr.mxu0 0.0
  %667 = vmatpush1.msra.mxu0 0.0
  %668 = vmatprep.subr.mxu0 0.0
  %669 = vmatpush1.msra.mxu0 0.0
  %670 = vmatprep.subr.mxu0 0.0
  %671 = vmatpush1.msra.mxu0 0.0
  %672 = vmatprep.subr.mxu0 0.0
  %673 = vmatpush1.msra.mxu0 0.0
  %674 = vmatprep.subr.mxu0 0.0
  %675 = vmatpush1.msra.mxu0 0.0
  %676 = vmatprep.subr.mxu0 0.0
  %677 = vmatpush1.msra.mxu0 0.0
  %678 = vmatprep.subr.mxu0 0.0
  %679 = vmatpush1.msra.mxu0 0.0
  %680 = vmatprep.subr.mxu0 0.0
  %681 = vmatpush1.msra.mxu0 0.0
  %682 = vmatprep.subr.mxu0 0.0
  %683 = vmatpush1.msra.mxu0 0.0
  %684 = vmatprep.subr.mxu0 0.0
  %685 = vmatpush1.msra.mxu0 0.0
  %686 = vmatprep.subr.mxu0 0.0
  %687 = vmatpush1.msra.mxu0 0.0
  %688 = vmatprep.subr.mxu0 0.0
  %689 = vmatpush1.msra.mxu0 0.0
  %690 = vmatprep.subr.mxu0 0.0
  %691 = vmatpush1.msra.mxu0 0.0
  %692 = vmatprep.subr.mxu0 0.0
  %693 = vmatpush1.msra.mxu0 0.0
  %694 = vmatprep.subr.mxu0 0.0
  %695 = vmatpush1.msra.mxu0 0.0
  %696 = vmatprep.subr.mxu0 0.0
  %697 = vmatpush1.msra.mxu0 0.0
  %698 = vmatprep.subr.mxu0 0.0
  %699 = vmatpush1.msra.mxu0 0.0
  %700 = vmatprep.subr.mxu0 0.0
  %701 = vmatpush1.msra.mxu0 0.0
  %702 = vmatprep.subr.mxu0 0.0
  %703 = vmatpush1.msra.mxu0 0.0
  %704 = vmatprep.subr.mxu0 0.0
  %705 = vmatpush1.msra.mxu0 0.0
  %706 = vmatprep.mubr.f32.mxu0 0.0
  %707 = vmatmul.mubr.f32.gmra.mrb[0].mxu0 %v640
  %v708 = vpop.f32.mrb[0].mxu0
  %v709 = vadd.f32 0.0, %v708
  %v710 = vpop.f32.mrb[0].mxu0
  %711 = vdwg.mxu0
  %v712 = vadd.f32 %v632, %v709
  %v713 = vxor.u32 %v712, 2147483648
  %v714 = vmul.f32 %v713, 1.442695
  %v715 = vpow.pop %v714
  %v716 = vadd.f32 %v715, 1.0
  %v717 = vrcp.pop %v716
  %v718 = vmul.f32 1.0, %v717
  %v719 = vld [vmem:[%s8] sm:$0x1]
  %v721 = vlaneseq
  %v722 = vshrl.u32 %v721, 7
  %v723 = vsub.s32 0, %v722
  %v724 = vrot.slane %v719, %v723
  %725 = vrot.lane.b32.xlu0 %v724, 64
  %v726 = vpop.permute.xlu0 %725
  %v728 = vadd.f32 %v709, %v726
  %730 = vrot.lane.b32.xlu0 %v728, 64
  %v731 = vpop.permute.xlu0 %730
  %v733 = vmul.f32 %v718, %v731
  %735 = vrot.lane.b32.xlu0 %v733, 64
  %v736 = vpop.permute.xlu0 %735
  %v738 = vadd.f32 %v632, %v736
  %v739 = vtanh.pop %v738
  %v740 = vsub.f32 1.0, %v718
  %742 = vrot.lane.b32.xlu0 %v739, 96
  %v743 = vpop.permute.xlu0 %742
  %v745 = vmul.f32 %v740, %v743
  %v746 = vmul.f32 %v718, %v630
  %v747 = vadd.f32 %v745, %v746
  %749 = vrot.lane.b32.xlu0 %v747, 96
  %v750 = vpop.permute.xlu0 %749
  %s752 = scalar_lea.vmem [#allocation3], 16
  %753 = vst.msk [vmem:[%s752] sm:$0xff] %vm220, %v750
  %s754 = scalar_lea.vmem %s1, 24
  %v755 = vld [vmem:[%s754] sm:$0xff]
  %vm756 = vcmp.ne.f32.partialorder %v755, 0.0
  %v757 = vsel %vm756, 1, 0
  %758 = vset.pattern.permute.xlu0 0
  %759 = vperm.xlu0 %758, %v757
  %v760 = vpop.permute.xlu0 %759
  %vm761 = vcmp.eq.s32.totalorder %v760, 1
  %v762 = vsel %vm761, 0.0, %v747
  %s763 = scalar_lea.vmem [#allocation2], 24
  %v764 = vld [vmem:[%s763] sm:$0xff]
  %v765 = vld [vmem:[%s7] sm:$0xff]
  %v766 = vld [vmem:[%s7 + $0x8] sm:$0xff]
  %v767 = vld [vmem:[%s7 + $0x10] sm:$0xff]
  %v768 = vld [vmem:[%s7 + $0x18] sm:$0xff]
  %770 = vrot.lane.b32.xlu0 %v762, 96
  %v771 = vpop.permute.xlu0 %770
  %v772 = vsel %vm220, %v771, 0
  %774 = vmatprep.subr.mxu0 0.0
  %775 = vmatpush1.msra.mxu0 %v765
  %776 = vmatprep.subr.mxu0 0.0
  %777 = vmatpush1.msra.mxu0 %v766
  %778 = vmatprep.subr.mxu0 0.0
  %779 = vmatpush1.msra.mxu0 %v767
  %780 = vmatprep.subr.mxu0 0.0
  %781 = vmatpush1.msra.mxu0 %v768
  %782 = vmatprep.subr.mxu0 0.0
  %783 = vmatpush1.msra.mxu0 0.0
  %784 = vmatprep.subr.mxu0 0.0
  %785 = vmatpush1.msra.mxu0 0.0
  %786 = vmatprep.subr.mxu0 0.0
  %787 = vmatpush1.msra.mxu0 0.0
  %788 = vmatprep.subr.mxu0 0.0
  %789 = vmatpush1.msra.mxu0 0.0
  %790 = vmatprep.subr.mxu0 0.0
  %791 = vmatpush1.msra.mxu0 0.0
  %792 = vmatprep.subr.mxu0 0.0
  %793 = vmatpush1.msra.mxu0 0.0
  %794 = vmatprep.subr.mxu0 0.0
  %795 = vmatpush1.msra.mxu0 0.0
  %796 = vmatprep.subr.mxu0 0.0
  %797 = vmatpush1.msra.mxu0 0.0
  %798 = vmatprep.subr.mxu0 0.0
  %799 = vmatpush1.msra.mxu0 0.0
  %800 = vmatprep.subr.mxu0 0.0
  %801 = vmatpush1.msra.mxu0 0.0
  %802 = vmatprep.subr.mxu0 0.0
  %803 = vmatpush1.msra.mxu0 0.0
  %804 = vmatprep.subr.mxu0 0.0
  %805 = vmatpush1.msra.mxu0 0.0
  %806 = vmatprep.subr.mxu0 0.0
  %807 = vmatpush1.msra.mxu0 0.0
  %808 = vmatprep.subr.mxu0 0.0
  %809 = vmatpush1.msra.mxu0 0.0
  %810 = vmatprep.subr.mxu0 0.0
  %811 = vmatpush1.msra.mxu0 0.0
  %812 = vmatprep.subr.mxu0 0.0
  %813 = vmatpush1.msra.mxu0 0.0
  %814 = vmatprep.subr.mxu0 0.0
  %815 = vmatpush1.msra.mxu0 0.0
  %816 = vmatprep.subr.mxu0 0.0
  %817 = vmatpush1.msra.mxu0 0.0
  %818 = vmatprep.subr.mxu0 0.0
  %819 = vmatpush1.msra.mxu0 0.0
  %820 = vmatprep.subr.mxu0 0.0
  %821 = vmatpush1.msra.mxu0 0.0
  %822 = vmatprep.subr.mxu0 0.0
  %823 = vmatpush1.msra.mxu0 0.0
  %824 = vmatprep.subr.mxu0 0.0
  %825 = vmatpush1.msra.mxu0 0.0
  %826 = vmatprep.subr.mxu0 0.0
  %827 = vmatpush1.msra.mxu0 0.0
  %828 = vmatprep.subr.mxu0 0.0
  %829 = vmatpush1.msra.mxu0 0.0
  %830 = vmatprep.subr.mxu0 0.0
  %831 = vmatpush1.msra.mxu0 0.0
  %832 = vmatprep.subr.mxu0 0.0
  %833 = vmatpush1.msra.mxu0 0.0
  %834 = vmatprep.subr.mxu0 0.0
  %835 = vmatpush1.msra.mxu0 0.0
  %836 = vmatprep.subr.mxu0 0.0
  %837 = vmatpush1.msra.mxu0 0.0
  %838 = vmatprep.mubr.f32.mxu0 0.0
  %839 = vmatmul.mubr.f32.gmra.mrb[0].mxu0 %v772
  %v840 = vpop.f32.mrb[0].mxu0
  %v841 = vadd.f32 0.0, %v840
  %v842 = vpop.f32.mrb[0].mxu0
  %843 = vdwg.mxu0
  %v844 = vadd.f32 %v764, %v841
  %v845 = vxor.u32 %v844, 2147483648
  %v846 = vmul.f32 %v845, 1.442695
  %v847 = vpow.pop %v846
  %v848 = vadd.f32 %v847, 1.0
  %v849 = vrcp.pop %v848
  %v850 = vmul.f32 1.0, %v849
  %v851 = vld [vmem:[%s8] sm:$0x1]
  %v853 = vlaneseq
  %v854 = vshrl.u32 %v853, 7
  %v855 = vsub.s32 0, %v854
  %v856 = vrot.slane %v851, %v855
  %857 = vrot.lane.b32.xlu0 %v856, 64
  %v858 = vpop.permute.xlu0 %857
  %v860 = vadd.f32 %v841, %v858
  %862 = vrot.lane.b32.xlu0 %v860, 64
  %v863 = vpop.permute.xlu0 %862
  %v865 = vmul.f32 %v850, %v863
  %867 = vrot.lane.b32.xlu0 %v865, 64
  %v868 = vpop.permute.xlu0 %867
  %v870 = vadd.f32 %v764, %v868
  %v871 = vtanh.pop %v870
  %v872 = vsub.f32 1.0, %v850
  %874 = vrot.lane.b32.xlu0 %v871, 96
  %v875 = vpop.permute.xlu0 %874
  %v877 = vmul.f32 %v872, %v875
  %v878 = vmul.f32 %v850, %v762
  %v879 = vadd.f32 %v877, %v878
  %881 = vrot.lane.b32.xlu0 %v879, 96
  %v882 = vpop.permute.xlu0 %881
  %s884 = scalar_lea.vmem [#allocation3], 24
  %885 = vst.msk [vmem:[%s884] sm:$0xff] %vm220, %v882
  %s886 = scalar_lea.vmem %s1, 32
  %v887 = vld [vmem:[%s886] sm:$0xff]
  %vm888 = vcmp.ne.f32.partialorder %v887, 0.0
  %v889 = vsel %vm888, 1, 0
  %890 = vset.pattern.permute.xlu0 0
  %891 = vperm.xlu0 %890, %v889
  %v892 = vpop.permute.xlu0 %891
  %vm893 = vcmp.eq.s32.totalorder %v892, 1
  %v894 = vsel %vm893, 0.0, %v879
  %s895 = scalar_lea.vmem [#allocation2], 32
  %v896 = vld [vmem:[%s895] sm:$0xff]
  %v897 = vld [vmem:[%s7] sm:$0xff]
  %v898 = vld [vmem:[%s7 + $0x8] sm:$0xff]
  %v899 = vld [vmem:[%s7 + $0x10] sm:$0xff]
  %v900 = vld [vmem:[%s7 + $0x18] sm:$0xff]
  %902 = vrot.lane.b32.xlu0 %v894, 96
  %v903 = vpop.permute.xlu0 %902
  %v904 = vsel %vm220, %v903, 0
  %906 = vmatprep.subr.mxu0 0.0
  %907 = vmatpush1.msra.mxu0 %v897
  %908 = vmatprep.subr.mxu0 0.0
  %909 = vmatpush1.msra.mxu0 %v898
  %910 = vmatprep.subr.mxu0 0.0
  %911 = vmatpush1.msra.mxu0 %v899
  %912 = vmatprep.subr.mxu0 0.0
  %913 = vmatpush1.msra.mxu0 %v900
  %914 = vmatprep.subr.mxu0 0.0
  %915 = vmatpush1.msra.mxu0 0.0
  %916 = vmatprep.subr.mxu0 0.0
  %917 = vmatpush1.msra.mxu0 0.0
  %918 = vmatprep.subr.mxu0 0.0
  %919 = vmatpush1.msra.mxu0 0.0
  %920 = vmatprep.subr.mxu0 0.0
  %921 = vmatpush1.msra.mxu0 0.0
  %922 = vmatprep.subr.mxu0 0.0
  %923 = vmatpush1.msra.mxu0 0.0
  %924 = vmatprep.subr.mxu0 0.0
  %925 = vmatpush1.msra.mxu0 0.0
  %926 = vmatprep.subr.mxu0 0.0
  %927 = vmatpush1.msra.mxu0 0.0
  %928 = vmatprep.subr.mxu0 0.0
  %929 = vmatpush1.msra.mxu0 0.0
  %930 = vmatprep.subr.mxu0 0.0
  %931 = vmatpush1.msra.mxu0 0.0
  %932 = vmatprep.subr.mxu0 0.0
  %933 = vmatpush1.msra.mxu0 0.0
  %934 = vmatprep.subr.mxu0 0.0
  %935 = vmatpush1.msra.mxu0 0.0
  %936 = vmatprep.subr.mxu0 0.0
  %937 = vmatpush1.msra.mxu0 0.0
  %938 = vmatprep.subr.mxu0 0.0
  %939 = vmatpush1.msra.mxu0 0.0
  %940 = vmatprep.subr.mxu0 0.0
  %941 = vmatpush1.msra.mxu0 0.0
  %942 = vmatprep.subr.mxu0 0.0
  %943 = vmatpush1.msra.mxu0 0.0
  %944 = vmatprep.subr.mxu0 0.0
  %945 = vmatpush1.msra.mxu0 0.0
  %946 = vmatprep.subr.mxu0 0.0
  %947 = vmatpush1.msra.mxu0 0.0
  %948 = vmatprep.subr.mxu0 0.0
  %949 = vmatpush1.msra.mxu0 0.0
  %950 = vmatprep.subr.mxu0 0.0
  %951 = vmatpush1.msra.mxu0 0.0
  %952 = vmatprep.subr.mxu0 0.0
  %953 = vmatpush1.msra.mxu0 0.0
  %954 = vmatprep.subr.mxu0 0.0
  %955 = vmatpush1.msra.mxu0 0.0
  %956 = vmatprep.subr.mxu0 0.0
  %957 = vmatpush1.msra.mxu0 0.0
  %958 = vmatprep.subr.mxu0 0.0
  %959 = vmatpush1.msra.mxu0 0.0
  %960 = vmatprep.subr.mxu0 0.0
  %961 = vmatpush1.msra.mxu0 0.0
  %962 = vmatprep.subr.mxu0 0.0
  %963 = vmatpush1.msra.mxu0 0.0
  %964 = vmatprep.subr.mxu0 0.0
  %965 = vmatpush1.msra.mxu0 0.0
  %966 = vmatprep.subr.mxu0 0.0
  %967 = vmatpush1.msra.mxu0 0.0
  %968 = vmatprep.subr.mxu0 0.0
  %969 = vmatpush1.msra.mxu0 0.0
  %970 = vmatprep.mubr.f32.mxu0 0.0
  %971 = vmatmul.mubr.f32.gmra.mrb[0].mxu0 %v904
  %v972 = vpop.f32.mrb[0].mxu0
  %v973 = vadd.f32 0.0, %v972
  %v974 = vpop.f32.mrb[0].mxu0
  %975 = vdwg.mxu0
  %v976 = vadd.f32 %v896, %v973
  %v977 = vxor.u32 %v976, 2147483648
  %v978 = vmul.f32 %v977, 1.442695
  %v979 = vpow.pop %v978
  %v980 = vadd.f32 %v979, 1.0
  %v981 = vrcp.pop %v980
  %v982 = vmul.f32 1.0, %v981
  %v983 = vld [vmem:[%s8] sm:$0x1]
  %v985 = vlaneseq
  %v986 = vshrl.u32 %v985, 7
  %v987 = vsub.s32 0, %v986
  %v988 = vrot.slane %v983, %v987
  %989 = vrot.lane.b32.xlu0 %v988, 64
  %v990 = vpop.permute.xlu0 %989
  %v992 = vadd.f32 %v973, %v990
  %994 = vrot.lane.b32.xlu0 %v992, 64
  %v995 = vpop.permute.xlu0 %994
  %v997 = vmul.f32 %v982, %v995
  %999 = vrot.lane.b32.xlu0 %v997, 64
  %v1000 = vpop.permute.xlu0 %999
  %v1002 = vadd.f32 %v896, %v1000
  %v1003 = vtanh.pop %v1002
  %v1004 = vsub.f32 1.0, %v982
  %1006 = vrot.lane.b32.xlu0 %v1003, 96
  %v1007 = vpop.permute.xlu0 %1006
  %v1009 = vmul.f32 %v1004, %v1007
  %v1010 = vmul.f32 %v982, %v894
  %v1011 = vadd.f32 %v1009, %v1010
  %1013 = vrot.lane.b32.xlu0 %v1011, 96
  %v1014 = vpop.permute.xlu0 %1013
  %s1016 = scalar_lea.vmem [#allocation3], 32
  %1017 = vst.msk [vmem:[%s1016] sm:$0xff] %vm220, %v1014
  %s1018 = scalar_lea.vmem %s1, 40
  %v1019 = vld [vmem:[%s1018] sm:$0xff]
  %vm1020 = vcmp.ne.f32.partialorder %v1019, 0.0
  %v1021 = vsel %vm1020, 1, 0
  %1022 = vset.pattern.permute.xlu0 0
  %1023 = vperm.xlu0 %1022, %v1021
  %v1024 = vpop.permute.xlu0 %1023
  %vm1025 = vcmp.eq.s32.totalorder %v1024, 1
  %v1026 = vsel %vm1025, 0.0, %v1011
  %s1027 = scalar_lea.vmem [#allocation2], 40
  %v1028 = vld [vmem:[%s1027] sm:$0xff]
  %v1029 = vld [vmem:[%s7] sm:$0xff]
  %v1030 = vld [vmem:[%s7 + $0x8] sm:$0xff]
  %v1031 = vld [vmem:[%s7 + $0x10] sm:$0xff]
  %v1032 = vld [vmem:[%s7 + $0x18] sm:$0xff]
  %1034 = vrot.lane.b32.xlu0 %v1026, 96
  %v1035 = vpop.permute.xlu0 %1034
  %v1036 = vsel %vm220, %v1035, 0
  %1038 = vmatprep.subr.mxu0 0.0
  %1039 = vmatpush1.msra.mxu0 %v1029
  %1040 = vmatprep.subr.mxu0 0.0
  %1041 = vmatpush1.msra.mxu0 %v1030
  %1042 = vmatprep.subr.mxu0 0.0
  %1043 = vmatpush1.msra.mxu0 %v1031
  %1044 = vmatprep.subr.mxu0 0.0
  %1045 = vmatpush1.msra.mxu0 %v1032
  %1046 = vmatprep.subr.mxu0 0.0
  %1047 = vmatpush1.msra.mxu0 0.0
  %1048 = vmatprep.subr.mxu0 0.0
  %1049 = vmatpush1.msra.mxu0 0.0
  %1050 = vmatprep.subr.mxu0 0.0
  %1051 = vmatpush1.msra.mxu0 0.0
  %1052 = vmatprep.subr.mxu0 0.0
  %1053 = vmatpush1.msra.mxu0 0.0
  %1054 = vmatprep.subr.mxu0 0.0
  %1055 = vmatpush1.msra.mxu0 0.0
  %1056 = vmatprep.subr.mxu0 0.0
  %1057 = vmatpush1.msra.mxu0 0.0
  %1058 = vmatprep.subr.mxu0 0.0
  %1059 = vmatpush1.msra.mxu0 0.0
  %1060 = vmatprep.subr.mxu0 0.0
  %1061 = vmatpush1.msra.mxu0 0.0
  %1062 = vmatprep.subr.mxu0 0.0
  %1063 = vmatpush1.msra.mxu0 0.0
  %1064 = vmatprep.subr.mxu0 0.0
  %1065 = vmatpush1.msra.mxu0 0.0
  %1066 = vmatprep.subr.mxu0 0.0
  %1067 = vmatpush1.msra.mxu0 0.0
  %1068 = vmatprep.subr.mxu0 0.0
  %1069 = vmatpush1.msra.mxu0 0.0
  %1070 = vmatprep.subr.mxu0 0.0
  %1071 = vmatpush1.msra.mxu0 0.0
  %1072 = vmatprep.subr.mxu0 0.0
  %1073 = vmatpush1.msra.mxu0 0.0
  %1074 = vmatprep.subr.mxu0 0.0
  %1075 = vmatpush1.msra.mxu0 0.0
  %1076 = vmatprep.subr.mxu0 0.0
  %1077 = vmatpush1.msra.mxu0 0.0
  %1078 = vmatprep.subr.mxu0 0.0
  %1079 = vmatpush1.msra.mxu0 0.0
  %1080 = vmatprep.subr.mxu0 0.0
  %1081 = vmatpush1.msra.mxu0 0.0
  %1082 = vmatprep.subr.mxu0 0.0
  %1083 = vmatpush1.msra.mxu0 0.0
  %1084 = vmatprep.subr.mxu0 0.0
  %1085 = vmatpush1.msra.mxu0 0.0
  %1086 = vmatprep.subr.mxu0 0.0
  %1087 = vmatpush1.msra.mxu0 0.0
  %1088 = vmatprep.subr.mxu0 0.0
  %1089 = vmatpush1.msra.mxu0 0.0
  %1090 = vmatprep.subr.mxu0 0.0
  %1091 = vmatpush1.msra.mxu0 0.0
  %1092 = vmatprep.subr.mxu0 0.0
  %1093 = vmatpush1.msra.mxu0 0.0
  %1094 = vmatprep.subr.mxu0 0.0
  %1095 = vmatpush1.msra.mxu0 0.0
  %1096 = vmatprep.subr.mxu0 0.0
  %1097 = vmatpush1.msra.mxu0 0.0
  %1098 = vmatprep.subr.mxu0 0.0
  %1099 = vmatpush1.msra.mxu0 0.0
  %1100 = vmatprep.subr.mxu0 0.0
  %1101 = vmatpush1.msra.mxu0 0.0
  %1102 = vmatprep.mubr.f32.mxu0 0.0
  %1103 = vmatmul.mubr.f32.gmra.mrb[0].mxu0 %v1036
  %v1104 = vpop.f32.mrb[0].mxu0
  %v1105 = vadd.f32 0.0, %v1104
  %v1106 = vpop.f32.mrb[0].mxu0
  %1107 = vdwg.mxu0
  %v1108 = vadd.f32 %v1028, %v1105
  %v1109 = vxor.u32 %v1108, 2147483648
  %v1110 = vmul.f32 %v1109, 1.442695
  %v1111 = vpow.pop %v1110
  %v1112 = vadd.f32 %v1111, 1.0
  %v1113 = vrcp.pop %v1112
  %v1114 = vmul.f32 1.0, %v1113
  %v1115 = vld [vmem:[%s8] sm:$0x1]
  %v1117 = vlaneseq
  %v1118 = vshrl.u32 %v1117, 7
  %v1119 = vsub.s32 0, %v1118
  %v1120 = vrot.slane %v1115, %v1119
  %1121 = vrot.lane.b32.xlu0 %v1120, 64
  %v1122 = vpop.permute.xlu0 %1121
  %v1124 = vadd.f32 %v1105, %v1122
  %1126 = vrot.lane.b32.xlu0 %v1124, 64
  %v1127 = vpop.permute.xlu0 %1126
  %v1129 = vmul.f32 %v1114, %v1127
  %1131 = vrot.lane.b32.xlu0 %v1129, 64
  %v1132 = vpop.permute.xlu0 %1131
  %v1134 = vadd.f32 %v1028, %v1132
  %v1135 = vtanh.pop %v1134
  %v1136 = vsub.f32 1.0, %v1114
  %1138 = vrot.lane.b32.xlu0 %v1135, 96
  %v1139 = vpop.permute.xlu0 %1138
  %v1141 = vmul.f32 %v1136, %v1139
  %v1142 = vmul.f32 %v1114, %v1026
  %v1143 = vadd.f32 %v1141, %v1142
  %1145 = vrot.lane.b32.xlu0 %v1143, 96
  %v1146 = vpop.permute.xlu0 %1145
  %s1148 = scalar_lea.vmem [#allocation3], 40
  %1149 = vst.msk [vmem:[%s1148] sm:$0xff] %vm220, %v1146
  %s1150 = scalar_lea.vmem %s1, 48
  %v1151 = vld [vmem:[%s1150] sm:$0xff]
  %vm1152 = vcmp.ne.f32.partialorder %v1151, 0.0
  %v1153 = vsel %vm1152, 1, 0
  %1154 = vset.pattern.permute.xlu0 0
  %1155 = vperm.xlu0 %1154, %v1153
  %v1156 = vpop.permute.xlu0 %1155
  %vm1157 = vcmp.eq.s32.totalorder %v1156, 1
  %v1158 = vsel %vm1157, 0.0, %v1143
  %s1159 = scalar_lea.vmem [#allocation2], 48
  %v1160 = vld [vmem:[%s1159] sm:$0xff]
  %v1161 = vld [vmem:[%s7] sm:$0xff]
  %v1162 = vld [vmem:[%s7 + $0x8] sm:$0xff]
  %v1163 = vld [vmem:[%s7 + $0x10] sm:$0xff]
  %v1164 = vld [vmem:[%s7 + $0x18] sm:$0xff]
  %1166 = vrot.lane.b32.xlu0 %v1158, 96
  %v1167 = vpop.permute.xlu0 %1166
  %v1168 = vsel %vm220, %v1167, 0
  %1170 = vmatprep.subr.mxu0 0.0
  %1171 = vmatpush1.msra.mxu0 %v1161
  %1172 = vmatprep.subr.mxu0 0.0
  %1173 = vmatpush1.msra.mxu0 %v1162
  %1174 = vmatprep.subr.mxu0 0.0
  %1175 = vmatpush1.msra.mxu0 %v1163
  %1176 = vmatprep.subr.mxu0 0.0
  %1177 = vmatpush1.msra.mxu0 %v1164
  %1178 = vmatprep.subr.mxu0 0.0
  %1179 = vmatpush1.msra.mxu0 0.0
  %1180 = vmatprep.subr.mxu0 0.0
  %1181 = vmatpush1.msra.mxu0 0.0
  %1182 = vmatprep.subr.mxu0 0.0
  %1183 = vmatpush1.msra.mxu0 0.0
  %1184 = vmatprep.subr.mxu0 0.0
  %1185 = vmatpush1.msra.mxu0 0.0
  %1186 = vmatprep.subr.mxu0 0.0
  %1187 = vmatpush1.msra.mxu0 0.0
  %1188 = vmatprep.subr.mxu0 0.0
  %1189 = vmatpush1.msra.mxu0 0.0
  %1190 = vmatprep.subr.mxu0 0.0
  %1191 = vmatpush1.msra.mxu0 0.0
  %1192 = vmatprep.subr.mxu0 0.0
  %1193 = vmatpush1.msra.mxu0 0.0
  %1194 = vmatprep.subr.mxu0 0.0
  %1195 = vmatpush1.msra.mxu0 0.0
  %1196 = vmatprep.subr.mxu0 0.0
  %1197 = vmatpush1.msra.mxu0 0.0
  %1198 = vmatprep.subr.mxu0 0.0
  %1199 = vmatpush1.msra.mxu0 0.0
  %1200 = vmatprep.subr.mxu0 0.0
  %1201 = vmatpush1.msra.mxu0 0.0
  %1202 = vmatprep.subr.mxu0 0.0
  %1203 = vmatpush1.msra.mxu0 0.0
  %1204 = vmatprep.subr.mxu0 0.0
  %1205 = vmatpush1.msra.mxu0 0.0
  %1206 = vmatprep.subr.mxu0 0.0
  %1207 = vmatpush1.msra.mxu0 0.0
  %1208 = vmatprep.subr.mxu0 0.0
  %1209 = vmatpush1.msra.mxu0 0.0
  %1210 = vmatprep.subr.mxu0 0.0
  %1211 = vmatpush1.msra.mxu0 0.0
  %1212 = vmatprep.subr.mxu0 0.0
  %1213 = vmatpush1.msra.mxu0 0.0
  %1214 = vmatprep.subr.mxu0 0.0
  %1215 = vmatpush1.msra.mxu0 0.0
  %1216 = vmatprep.subr.mxu0 0.0
  %1217 = vmatpush1.msra.mxu0 0.0
  %1218 = vmatprep.subr.mxu0 0.0
  %1219 = vmatpush1.msra.mxu0 0.0
  %1220 = vmatprep.subr.mxu0 0.0
  %1221 = vmatpush1.msra.mxu0 0.0
  %1222 = vmatprep.subr.mxu0 0.0
  %1223 = vmatpush1.msra.mxu0 0.0
  %1224 = vmatprep.subr.mxu0 0.0
  %1225 = vmatpush1.msra.mxu0 0.0
  %1226 = vmatprep.subr.mxu0 0.0
  %1227 = vmatpush1.msra.mxu0 0.0
  %1228 = vmatprep.subr.mxu0 0.0
  %1229 = vmatpush1.msra.mxu0 0.0
  %1230 = vmatprep.subr.mxu0 0.0
  %1231 = vmatpush1.msra.mxu0 0.0
  %1232 = vmatprep.subr.mxu0 0.0
  %1233 = vmatpush1.msra.mxu0 0.0
  %1234 = vmatprep.mubr.f32.mxu0 0.0
  %1235 = vmatmul.mubr.f32.gmra.mrb[0].mxu0 %v1168
  %v1236 = vpop.f32.mrb[0].mxu0
  %v1237 = vadd.f32 0.0, %v1236
  %v1238 = vpop.f32.mrb[0].mxu0
  %1239 = vdwg.mxu0
  %v1240 = vadd.f32 %v1160, %v1237
  %v1241 = vxor.u32 %v1240, 2147483648
  %v1242 = vmul.f32 %v1241, 1.442695
  %v1243 = vpow.pop %v1242
  %v1244 = vadd.f32 %v1243, 1.0
  %v1245 = vrcp.pop %v1244
  %v1246 = vmul.f32 1.0, %v1245
  %v1247 = vld [vmem:[%s8] sm:$0x1]
  %v1249 = vlaneseq
  %v1250 = vshrl.u32 %v1249, 7
  %v1251 = vsub.s32 0, %v1250
  %v1252 = vrot.slane %v1247, %v1251
  %1253 = vrot.lane.b32.xlu0 %v1252, 64
  %v1254 = vpop.permute.xlu0 %1253
  %v1256 = vadd.f32 %v1237, %v1254
  %1258 = vrot.lane.b32.xlu0 %v1256, 64
  %v1259 = vpop.permute.xlu0 %1258
  %v1261 = vmul.f32 %v1246, %v1259
  %1263 = vrot.lane.b32.xlu0 %v1261, 64
  %v1264 = vpop.permute.xlu0 %1263
  %v1266 = vadd.f32 %v1160, %v1264
  %v1267 = vtanh.pop %v1266
  %v1268 = vsub.f32 1.0, %v1246
  %1270 = vrot.lane.b32.xlu0 %v1267, 96
  %v1271 = vpop.permute.xlu0 %1270
  %v1273 = vmul.f32 %v1268, %v1271
  %v1274 = vmul.f32 %v1246, %v1158
  %v1275 = vadd.f32 %v1273, %v1274
  %1277 = vrot.lane.b32.xlu0 %v1275, 96
  %v1278 = vpop.permute.xlu0 %1277
  %s1280 = scalar_lea.vmem [#allocation3], 48
  %1281 = vst.msk [vmem:[%s1280] sm:$0xff] %vm220, %v1278
  %s1282 = scalar_lea.vmem %s1, 56
  %v1283 = vld [vmem:[%s1282] sm:$0xff]
  %vm1284 = vcmp.ne.f32.partialorder %v1283, 0.0
  %v1285 = vsel %vm1284, 1, 0
  %1286 = vset.pattern.permute.xlu0 0
  %1287 = vperm.xlu0 %1286, %v1285
  %v1288 = vpop.permute.xlu0 %1287
  %vm1289 = vcmp.eq.s32.totalorder %v1288, 1
  %v1290 = vsel %vm1289, 0.0, %v1275
  %s1291 = scalar_lea.vmem [#allocation2], 56
  %v1292 = vld [vmem:[%s1291] sm:$0xff]
  %v1293 = vld [vmem:[%s7] sm:$0xff]
  %v1294 = vld [vmem:[%s7 + $0x8] sm:$0xff]
  %v1295 = vld [vmem:[%s7 + $0x10] sm:$0xff]
  %v1296 = vld [vmem:[%s7 + $0x18] sm:$0xff]
  %1298 = vrot.lane.b32.xlu0 %v1290, 96
  %v1299 = vpop.permute.xlu0 %1298
  %v1300 = vsel %vm220, %v1299, 0
  %1302 = vmatprep.subr.mxu0 0.0
  %1303 = vmatpush1.msra.mxu0 %v1293
  %1304 = vmatprep.subr.mxu0 0.0
  %1305 = vmatpush1.msra.mxu0 %v1294
  %1306 = vmatprep.subr.mxu0 0.0
  %1307 = vmatpush1.msra.mxu0 %v1295
  %1308 = vmatprep.subr.mxu0 0.0
  %1309 = vmatpush1.msra.mxu0 %v1296
  %1310 = vmatprep.subr.mxu0 0.0
  %1311 = vmatpush1.msra.mxu0 0.0
  %1312 = vmatprep.subr.mxu0 0.0
  %1313 = vmatpush1.msra.mxu0 0.0
  %1314 = vmatprep.subr.mxu0 0.0
  %1315 = vmatpush1.msra.mxu0 0.0
  %1316 = vmatprep.subr.mxu0 0.0
  %1317 = vmatpush1.msra.mxu0 0.0
  %1318 = vmatprep.subr.mxu0 0.0
  %1319 = vmatpush1.msra.mxu0 0.0
  %1320 = vmatprep.subr.mxu0 0.0
  %1321 = vmatpush1.msra.mxu0 0.0
  %1322 = vmatprep.subr.mxu0 0.0
  %1323 = vmatpush1.msra.mxu0 0.0
  %1324 = vmatprep.subr.mxu0 0.0
  %1325 = vmatpush1.msra.mxu0 0.0
  %1326 = vmatprep.subr.mxu0 0.0
  %1327 = vmatpush1.msra.mxu0 0.0
  %1328 = vmatprep.subr.mxu0 0.0
  %1329 = vmatpush1.msra.mxu0 0.0
  %1330 = vmatprep.subr.mxu0 0.0
  %1331 = vmatpush1.msra.mxu0 0.0
  %1332 = vmatprep.subr.mxu0 0.0
  %1333 = vmatpush1.msra.mxu0 0.0
  %1334 = vmatprep.subr.mxu0 0.0
  %1335 = vmatpush1.msra.mxu0 0.0
  %1336 = vmatprep.subr.mxu0 0.0
  %1337 = vmatpush1.msra.mxu0 0.0
  %1338 = vmatprep.subr.mxu0 0.0
  %1339 = vmatpush1.msra.mxu0 0.0
  %1340 = vmatprep.subr.mxu0 0.0
  %1341 = vmatpush1.msra.mxu0 0.0
  %1342 = vmatprep.subr.mxu0 0.0
  %1343 = vmatpush1.msra.mxu0 0.0
  %1344 = vmatprep.subr.mxu0 0.0
  %1345 = vmatpush1.msra.mxu0 0.0
  %1346 = vmatprep.subr.mxu0 0.0
  %1347 = vmatpush1.msra.mxu0 0.0
  %1348 = vmatprep.subr.mxu0 0.0
  %1349 = vmatpush1.msra.mxu0 0.0
  %1350 = vmatprep.subr.mxu0 0.0
  %1351 = vmatpush1.msra.mxu0 0.0
  %1352 = vmatprep.subr.mxu0 0.0
  %1353 = vmatpush1.msra.mxu0 0.0
  %1354 = vmatprep.subr.mxu0 0.0
  %1355 = vmatpush1.msra.mxu0 0.0
  %1356 = vmatprep.subr.mxu0 0.0
  %1357 = vmatpush1.msra.mxu0 0.0
  %1358 = vmatprep.subr.mxu0 0.0
  %1359 = vmatpush1.msra.mxu0 0.0
  %1360 = vmatprep.subr.mxu0 0.0
  %1361 = vmatpush1.msra.mxu0 0.0
  %1362 = vmatprep.subr.mxu0 0.0
  %1363 = vmatpush1.msra.mxu0 0.0
  %1364 = vmatprep.subr.mxu0 0.0
  %1365 = vmatpush1.msra.mxu0 0.0
  %1366 = vmatprep.mubr.f32.mxu0 0.0
  %1367 = vmatmul.mubr.f32.gmra.mrb[0].mxu0 %v1300
  %v1368 = vpop.f32.mrb[0].mxu0
  %v1369 = vadd.f32 0.0, %v1368
  %v1370 = vpop.f32.mrb[0].mxu0
  %1371 = vdwg.mxu0
  %v1372 = vadd.f32 %v1292, %v1369
  %v1373 = vxor.u32 %v1372, 2147483648
  %v1374 = vmul.f32 %v1373, 1.442695
  %v1375 = vpow.pop %v1374
  %v1376 = vadd.f32 %v1375, 1.0
  %v1377 = vrcp.pop %v1376
  %v1378 = vmul.f32 1.0, %v1377
  %v1379 = vld [vmem:[%s8] sm:$0x1]
  %v1381 = vlaneseq
  %v1382 = vshrl.u32 %v1381, 7
  %v1383 = vsub.s32 0, %v1382
  %v1384 = vrot.slane %v1379, %v1383
  %1385 = vrot.lane.b32.xlu0 %v1384, 64
  %v1386 = vpop.permute.xlu0 %1385
  %v1388 = vadd.f32 %v1369, %v1386
  %1390 = vrot.lane.b32.xlu0 %v1388, 64
  %v1391 = vpop.permute.xlu0 %1390
  %v1393 = vmul.f32 %v1378, %v1391
  %1395 = vrot.lane.b32.xlu0 %v1393, 64
  %v1396 = vpop.permute.xlu0 %1395
  %v1398 = vadd.f32 %v1292, %v1396
  %v1399 = vtanh.pop %v1398
  %v1400 = vsub.f32 1.0, %v1378
  %1402 = vrot.lane.b32.xlu0 %v1399, 96
  %v1403 = vpop.permute.xlu0 %1402
  %v1405 = vmul.f32 %v1400, %v1403
  %v1406 = vmul.f32 %v1378, %v1290
  %v1407 = vadd.f32 %v1405, %v1406
  %1409 = vrot.lane.b32.xlu0 %v1407, 96
  %v1410 = vpop.permute.xlu0 %1409
  %s1412 = scalar_lea.vmem [#allocation3], 56
  %1413 = vst.msk [vmem:[%s1412] sm:$0xff] %vm220, %v1410
  %v1414 = vld [vmem:[#allocation3] sm:$0xff]
  %v1415 = vld [vmem:[#allocation3 + $0x8] sm:$0xff]
  %v1416 = vld [vmem:[#allocation3 + $0x10] sm:$0xff]
  %v1417 = vld [vmem:[#allocation3 + $0x18] sm:$0xff]
  %v1418 = vld [vmem:[#allocation3 + $0x20] sm:$0xff]
  %v1419 = vld [vmem:[#allocation3 + $0x28] sm:$0xff]
  %v1420 = vld [vmem:[#allocation3 + $0x30] sm:$0xff]
  %v1421 = vld [vmem:[#allocation3 + $0x38] sm:$0xff]
  %v1422 = vld [vmem:[%s9] sm:$0xff]
  %v1423 = vld [vmem:[%s9 + $0x8] sm:$0xff]
  %v1424 = vld [vmem:[%s9 + $0x10] sm:$0xff]
  %v1425 = vld [vmem:[%s9 + $0x18] sm:$0xff]
  %v1426 = vld [vmem:[%s9 + $0x20] sm:$0xff]
  %v1427 = vld [vmem:[%s9 + $0x28] sm:$0xff]
  %v1428 = vld [vmem:[%s9 + $0x30] sm:$0xff]
  %v1429 = vld [vmem:[%s9 + $0x38] sm:$0xff]
  %v1430 = vld [vmem:[%s10] sm:$0x3]
  %v1432 = vlaneseq
  %v1433 = vshrl.u32 %v1432, 7
  %v1434 = vsub.s32 0, %v1433
  %v1435 = vrot.slane %v1430, %v1434
  %v1436 = vlaneseq
  %v1437 = vshrl.u32 %v1436, 7
  %v1438 = vsub.s32 1, %v1437
  %v1439 = vrot.slane %v1430, %v1438
  %v1443 = vsel %vm220, %v1414, 0
  %v1446 = vsel %vm220, %v1415, 0
  %v1449 = vsel %vm220, %v1416, 0
  %v1452 = vsel %vm220, %v1417, 0
  %v1455 = vsel %vm220, %v1418, 0
  %v1458 = vsel %vm220, %v1419, 0
  %v1461 = vsel %vm220, %v1420, 0
  %v1464 = vsel %vm220, %v1421, 0
  %1466 = vmatprep.subr.mxu0 %v1423
  %1467 = vmatpush1.msra.mxu0 %v1422
  %1468 = vmatprep.subr.mxu0 %v1425
  %1469 = vmatpush1.msra.mxu0 %v1424
  %1470 = vmatprep.subr.mxu0 %v1427
  %1471 = vmatpush1.msra.mxu0 %v1426
  %1472 = vmatprep.subr.mxu0 %v1429
  %1473 = vmatpush1.msra.mxu0 %v1428
  %1474 = vmatprep.subr.mxu0 0.0
  %1475 = vmatpush1.msra.mxu0 0.0
  %1476 = vmatprep.subr.mxu0 0.0
  %1477 = vmatpush1.msra.mxu0 0.0
  %1478 = vmatprep.subr.mxu0 0.0
  %1479 = vmatpush1.msra.mxu0 0.0
  %1480 = vmatprep.subr.mxu0 0.0
  %1481 = vmatpush1.msra.mxu0 0.0
  %1482 = vmatprep.subr.mxu0 0.0
  %1483 = vmatpush1.msra.mxu0 0.0
  %1484 = vmatprep.subr.mxu0 0.0
  %1485 = vmatpush1.msra.mxu0 0.0
  %1486 = vmatprep.subr.mxu0 0.0
  %1487 = vmatpush1.msra.mxu0 0.0
  %1488 = vmatprep.subr.mxu0 0.0
  %1489 = vmatpush1.msra.mxu0 0.0
  %1490 = vmatprep.subr.mxu0 0.0
  %1491 = vmatpush1.msra.mxu0 0.0
  %1492 = vmatprep.subr.mxu0 0.0
  %1493 = vmatpush1.msra.mxu0 0.0
  %1494 = vmatprep.subr.mxu0 0.0
  %1495 = vmatpush1.msra.mxu0 0.0
  %1496 = vmatprep.subr.mxu0 0.0
  %1497 = vmatpush1.msra.mxu0 0.0
  %1498 = vmatprep.subr.mxu0 0.0
  %1499 = vmatpush1.msra.mxu0 0.0
  %1500 = vmatprep.subr.mxu0 0.0
  %1501 = vmatpush1.msra.mxu0 0.0
  %1502 = vmatprep.subr.mxu0 0.0
  %1503 = vmatpush1.msra.mxu0 0.0
  %1504 = vmatprep.subr.mxu0 0.0
  %1505 = vmatpush1.msra.mxu0 0.0
  %1506 = vmatprep.subr.mxu0 0.0
  %1507 = vmatpush1.msra.mxu0 0.0
  %1508 = vmatprep.subr.mxu0 0.0
  %1509 = vmatpush1.msra.mxu0 0.0
  %1510 = vmatprep.subr.mxu0 0.0
  %1511 = vmatpush1.msra.mxu0 0.0
  %1512 = vmatprep.subr.mxu0 0.0
  %1513 = vmatpush1.msra.mxu0 0.0
  %1514 = vmatprep.subr.mxu0 0.0
  %1515 = vmatpush1.msra.mxu0 0.0
  %1516 = vmatprep.subr.mxu0 0.0
  %1517 = vmatpush1.msra.mxu0 0.0
  %1518 = vmatprep.subr.mxu0 0.0
  %1519 = vmatpush1.msra.mxu0 0.0
  %1520 = vmatprep.subr.mxu0 0.0
  %1521 = vmatpush1.msra.mxu0 0.0
  %1522 = vmatprep.subr.mxu0 0.0
  %1523 = vmatpush1.msra.mxu0 0.0
  %1524 = vmatprep.subr.mxu0 0.0
  %1525 = vmatpush1.msra.mxu0 0.0
  %1526 = vmatprep.subr.mxu0 0.0
  %1527 = vmatpush1.msra.mxu0 0.0
  %1528 = vmatprep.subr.mxu0 0.0
  %1529 = vmatpush1.msra.mxu0 0.0
  %1530 = vmatprep.mubr.f32.mxu0 0.0
  %1531 = vmatmul.mubr.f32.gmra.mrb[0].mxu0 %v1443
  %v1532 = vpop.f32.mrb[0].mxu0
  %v1533 = vadd.f32 %v1435, %v1532
  %v1534 = vpop.f32.mrb[0].mxu0
  %v1535 = vadd.f32 %v1439, %v1534
  %1536 = vmatprep.mubr.f32.mxu0 0.0
  %1537 = vmatmul.mubr.f32.gmra.mrb[0].mxu0 %v1446
  %v1538 = vpop.f32.mrb[0].mxu0
  %v1539 = vadd.f32 %v1435, %v1538
  %v1540 = vpop.f32.mrb[0].mxu0
  %v1541 = vadd.f32 %v1439, %v1540
  %1542 = vmatprep.mubr.f32.mxu0 0.0
  %1543 = vmatmul.mubr.f32.gmra.mrb[0].mxu0 %v1449
  %v1544 = vpop.f32.mrb[0].mxu0
  %v1545 = vadd.f32 %v1435, %v1544
  %v1546 = vpop.f32.mrb[0].mxu0
  %v1547 = vadd.f32 %v1439, %v1546
  %1548 = vmatprep.mubr.f32.mxu0 0.0
  %1549 = vmatmul.mubr.f32.gmra.mrb[0].mxu0 %v1452
  %v1550 = vpop.f32.mrb[0].mxu0
  %v1551 = vadd.f32 %v1435, %v1550
  %v1552 = vpop.f32.mrb[0].mxu0
  %v1553 = vadd.f32 %v1439, %v1552
  %1554 = vmatprep.mubr.f32.mxu0 0.0
  %1555 = vmatmul.mubr.f32.gmra.mrb[0].mxu0 %v1455
  %v1556 = vpop.f32.mrb[0].mxu0
  %v1557 = vadd.f32 %v1435, %v1556
  %v1558 = vpop.f32.mrb[0].mxu0
  %v1559 = vadd.f32 %v1439, %v1558
  %1560 = vmatprep.mubr.f32.mxu0 0.0
  %1561 = vmatmul.mubr.f32.gmra.mrb[0].mxu0 %v1458
  %v1562 = vpop.f32.mrb[0].mxu0
  %v1563 = vadd.f32 %v1435, %v1562
  %v1564 = vpop.f32.mrb[0].mxu0
  %v1565 = vadd.f32 %v1439, %v1564
  %1566 = vmatprep.mubr.f32.mxu0 0.0
  %1567 = vmatmul.mubr.f32.gmra.mrb[0].mxu0 %v1461
  %v1568 = vpop.f32.mrb[0].mxu0
  %v1569 = vadd.f32 %v1435, %v1568
  %v1570 = vpop.f32.mrb[0].mxu0
  %v1571 = vadd.f32 %v1439, %v1570
  %1572 = vmatprep.mubr.f32.mxu0 0.0
  %1573 = vmatmul.mubr.f32.gmra.mrb[0].mxu0 %v1464
  %v1574 = vpop.f32.mrb[0].mxu0
  %v1575 = vadd.f32 %v1435, %v1574
  %v1576 = vpop.f32.mrb[0].mxu0
  %v1577 = vadd.f32 %v1439, %v1576
  %1578 = vdwg.mxu0
  %v1579 = vmax.f32 %v1533, 0.0
  %v1580 = vmax.f32 %v1535, 0.0
  %v1581 = vmax.f32 %v1539, 0.0
  %v1582 = vmax.f32 %v1541, 0.0
  %v1583 = vmax.f32 %v1545, 0.0
  %v1584 = vmax.f32 %v1547, 0.0
  %v1585 = vmax.f32 %v1551, 0.0
  %v1586 = vmax.f32 %v1553, 0.0
  %v1587 = vmax.f32 %v1557, 0.0
  %v1588 = vmax.f32 %v1559, 0.0
  %v1589 = vmax.f32 %v1563, 0.0
  %v1590 = vmax.f32 %v1565, 0.0
  %v1591 = vmax.f32 %v1569, 0.0
  %v1592 = vmax.f32 %v1571, 0.0
  %v1593 = vmax.f32 %v1575, 0.0
  %v1594 = vmax.f32 %v1577, 0.0
  %v1595 = vld [vmem:[%s11] sm:$0xff]
  %v1596 = vld [vmem:[%s11 + $0x8] sm:$0xff]
  %v1597 = vld [vmem:[%s11 + $0x10] sm:$0xff]
  %v1598 = vld [vmem:[%s11 + $0x18] sm:$0xff]
  %v1599 = vld [vmem:[%s11 + $0x20] sm:$0xff]
  %v1600 = vld [vmem:[%s11 + $0x28] sm:$0xff]
  %v1601 = vld [vmem:[%s11 + $0x30] sm:$0xff]
  %v1602 = vld [vmem:[%s11 + $0x38] sm:$0xff]
  %v1603 = vld [vmem:[%s11 + $0x40] sm:$0xff]
  %v1604 = vld [vmem:[%s11 + $0x48] sm:$0xff]
  %v1605 = vld [vmem:[%s11 + $0x50] sm:$0xff]
  %v1606 = vld [vmem:[%s11 + $0x58] sm:$0xff]
  %v1607 = vld [vmem:[%s11 + $0x60] sm:$0xff]
  %v1608 = vld [vmem:[%s11 + $0x68] sm:$0xff]
  %v1609 = vld [vmem:[%s11 + $0x70] sm:$0xff]
  %v1610 = vld [vmem:[%s11 + $0x78] sm:$0xff]
  %v1611 = vld [vmem:[%s12] sm:$0x1]
  %v1613 = vlaneseq
  %v1614 = vshrl.u32 %v1613, 7
  %v1615 = vsub.s32 0, %v1614
  %v1616 = vrot.slane %v1611, %v1615
  %1618 = vmatprep.subr.mxu0 0.0
  %1619 = vmatpush1.msra.mxu0 %v1595
  %1620 = vmatprep.subr.mxu0 0.0
  %1621 = vmatpush1.msra.mxu0 %v1596
  %1622 = vmatprep.subr.mxu0 0.0
  %1623 = vmatpush1.msra.mxu0 %v1597
  %1624 = vmatprep.subr.mxu0 0.0
  %1625 = vmatpush1.msra.mxu0 %v1598
  %1626 = vmatprep.subr.mxu0 0.0
  %1627 = vmatpush1.msra.mxu0 %v1599
  %1628 = vmatprep.subr.mxu0 0.0
  %1629 = vmatpush1.msra.mxu0 %v1600
  %1630 = vmatprep.subr.mxu0 0.0
  %1631 = vmatpush1.msra.mxu0 %v1601
  %1632 = vmatprep.subr.mxu0 0.0
  %1633 = vmatpush1.msra.mxu0 %v1602
  %1634 = vmatprep.subr.mxu0 0.0
  %1635 = vmatpush1.msra.mxu0 %v1603
  %1636 = vmatprep.subr.mxu0 0.0
  %1637 = vmatpush1.msra.mxu0 %v1604
  %1638 = vmatprep.subr.mxu0 0.0
  %1639 = vmatpush1.msra.mxu0 %v1605
  %1640 = vmatprep.subr.mxu0 0.0
  %1641 = vmatpush1.msra.mxu0 %v1606
  %1642 = vmatprep.subr.mxu0 0.0
  %1643 = vmatpush1.msra.mxu0 %v1607
  %1644 = vmatprep.subr.mxu0 0.0
  %1645 = vmatpush1.msra.mxu0 %v1608
  %1646 = vmatprep.subr.mxu0 0.0
  %1647 = vmatpush1.msra.mxu0 %v1609
  %1648 = vmatprep.subr.mxu0 0.0
  %1649 = vmatpush1.msra.mxu0 %v1610
  %1650 = vmatprep.subr.mxu0 0.0
  %1651 = vmatpush1.msra.mxu0 0.0
  %1652 = vmatprep.subr.mxu0 0.0
  %1653 = vmatpush1.msra.mxu0 0.0
  %1654 = vmatprep.subr.mxu0 0.0
  %1655 = vmatpush1.msra.mxu0 0.0
  %1656 = vmatprep.subr.mxu0 0.0
  %1657 = vmatpush1.msra.mxu0 0.0
  %1658 = vmatprep.subr.mxu0 0.0
  %1659 = vmatpush1.msra.mxu0 0.0
  %1660 = vmatprep.subr.mxu0 0.0
  %1661 = vmatpush1.msra.mxu0 0.0
  %1662 = vmatprep.subr.mxu0 0.0
  %1663 = vmatpush1.msra.mxu0 0.0
  %1664 = vmatprep.subr.mxu0 0.0
  %1665 = vmatpush1.msra.mxu0 0.0
  %1666 = vmatprep.subr.mxu0 0.0
  %1667 = vmatpush1.msra.mxu0 0.0
  %1668 = vmatprep.subr.mxu0 0.0
  %1669 = vmatpush1.msra.mxu0 0.0
  %1670 = vmatprep.subr.mxu0 0.0
  %1671 = vmatpush1.msra.mxu0 0.0
  %1672 = vmatprep.subr.mxu0 0.0
  %1673 = vmatpush1.msra.mxu0 0.0
  %1674 = vmatprep.subr.mxu0 0.0
  %1675 = vmatpush1.msra.mxu0 0.0
  %1676 = vmatprep.subr.mxu0 0.0
  %1677 = vmatpush1.msra.mxu0 0.0
  %1678 = vmatprep.subr.mxu0 0.0
  %1679 = vmatpush1.msra.mxu0 0.0
  %1680 = vmatprep.subr.mxu0 0.0
  %1681 = vmatpush1.msra.mxu0 0.0
  %1682 = vmatprep.mubr.f32.mxu0 0.0
  %1683 = vmatmul.mubr.f32.gmra.mrb[0].mxu0 %v1579
  %v1684 = vpop.f32.mrb[0].mxu0
  %v1685 = vadd.f32 %v1616, %v1684
  %v1686 = vpop.f32.mrb[0].mxu0
  %1687 = vmatprep.mubr.f32.mxu0 0.0
  %1688 = vmatmul.mubr.f32.gmra.mrb[0].mxu0 %v1581
  %v1689 = vpop.f32.mrb[0].mxu0
  %v1690 = vadd.f32 %v1616, %v1689
  %v1691 = vpop.f32.mrb[0].mxu0
  %1692 = vmatprep.mubr.f32.mxu0 0.0
  %1693 = vmatmul.mubr.f32.gmra.mrb[0].mxu0 %v1583
  %v1694 = vpop.f32.mrb[0].mxu0
  %v1695 = vadd.f32 %v1616, %v1694
  %v1696 = vpop.f32.mrb[0].mxu0
  %1697 = vmatprep.mubr.f32.mxu0 0.0
  %1698 = vmatmul.mubr.f32.gmra.mrb[0].mxu0 %v1585
  %v1699 = vpop.f32.mrb[0].mxu0
  %v1700 = vadd.f32 %v1616, %v1699
  %v1701 = vpop.f32.mrb[0].mxu0
  %1702 = vmatprep.mubr.f32.mxu0 0.0
  %1703 = vmatmul.mubr.f32.gmra.mrb[0].mxu0 %v1587
  %v1704 = vpop.f32.mrb[0].mxu0
  %v1705 = vadd.f32 %v1616, %v1704
  %v1706 = vpop.f32.mrb[0].mxu0
  %1707 = vmatprep.mubr.f32.mxu0 0.0
  %1708 = vmatmul.mubr.f32.gmra.mrb[0].mxu0 %v1589
  %v1709 = vpop.f32.mrb[0].mxu0
  %v1710 = vadd.f32 %v1616, %v1709
  %v1711 = vpop.f32.mrb[0].mxu0
  %1712 = vmatprep.mubr.f32.mxu0 0.0
  %1713 = vmatmul.mubr.f32.gmra.mrb[0].mxu0 %v1591
  %v1714 = vpop.f32.mrb[0].mxu0
  %v1715 = vadd.f32 %v1616, %v1714
  %v1716 = vpop.f32.mrb[0].mxu0
  %1717 = vmatprep.mubr.f32.mxu0 0.0
  %1718 = vmatmul.mubr.f32.gmra.mrb[0].mxu0 %v1593
  %v1719 = vpop.f32.mrb[0].mxu0
  %v1720 = vadd.f32 %v1616, %v1719
  %v1721 = vpop.f32.mrb[0].mxu0
  %1722 = vdwg.mxu0
  %1723 = vst.msk [vmem:[%s15] sm:$0xff] %vm220, %v1685
  %1724 = vst.msk [vmem:[%s15 + $0x8] sm:$0xff] %vm220, %v1690
  %1725 = vst.msk [vmem:[%s15 + $0x10] sm:$0xff] %vm220, %v1695
  %1726 = vst.msk [vmem:[%s15 + $0x18] sm:$0xff] %vm220, %v1700
  %1727 = vst.msk [vmem:[%s15 + $0x20] sm:$0xff] %vm220, %v1705
  %1728 = vst.msk [vmem:[%s15 + $0x28] sm:$0xff] %vm220, %v1710
  %1729 = vst.msk [vmem:[%s15 + $0x30] sm:$0xff] %vm220, %v1715
  %1730 = vst.msk [vmem:[%s15 + $0x38] sm:$0xff] %vm220, %v1720
  %v1731 = vld [vmem:[%s13] sm:$0xff]
  %v1732 = vld [vmem:[%s13 + $0x8] sm:$0xff]
  %v1733 = vld [vmem:[%s13 + $0x10] sm:$0xff]
  %v1734 = vld [vmem:[%s13 + $0x18] sm:$0xff]
  %v1735 = vld [vmem:[%s13 + $0x20] sm:$0xff]
  %v1736 = vld [vmem:[%s13 + $0x28] sm:$0xff]
  %v1737 = vld [vmem:[%s13 + $0x30] sm:$0xff]
  %v1738 = vld [vmem:[%s13 + $0x38] sm:$0xff]
  %v1739 = vld [vmem:[%s13 + $0x40] sm:$0xff]
  %v1740 = vld [vmem:[%s13 + $0x48] sm:$0xff]
  %v1741 = vld [vmem:[%s13 + $0x50] sm:$0xff]
  %v1742 = vld [vmem:[%s13 + $0x58] sm:$0xff]
  %v1743 = vld [vmem:[%s13 + $0x60] sm:$0xff]
  %v1744 = vld [vmem:[%s13 + $0x68] sm:$0xff]
  %v1745 = vld [vmem:[%s13 + $0x70] sm:$0xff]
  %v1746 = vld [vmem:[%s13 + $0x78] sm:$0xff]
  %v1747 = vld [vmem:[#allocation4] sm:$0x1]
  %v1749 = vlaneseq
  %v1750 = vshrl.u32 %v1749, 7
  %v1751 = vsub.s32 0, %v1750
  %v1752 = vrot.slane %v1747, %v1751
  %1754 = vmatprep.subr.mxu0 0.0
  %1755 = vmatpush1.msra.mxu0 %v1731
  %1756 = vmatprep.subr.mxu0 0.0
  %1757 = vmatpush1.msra.mxu0 %v1732
  %1758 = vmatprep.subr.mxu0 0.0
  %1759 = vmatpush1.msra.mxu0 %v1733
  %1760 = vmatprep.subr.mxu0 0.0
  %1761 = vmatpush1.msra.mxu0 %v1734
  %1762 = vmatprep.subr.mxu0 0.0
  %1763 = vmatpush1.msra.mxu0 %v1735
  %1764 = vmatprep.subr.mxu0 0.0
  %1765 = vmatpush1.msra.mxu0 %v1736
  %1766 = vmatprep.subr.mxu0 0.0
  %1767 = vmatpush1.msra.mxu0 %v1737
  %1768 = vmatprep.subr.mxu0 0.0
  %1769 = vmatpush1.msra.mxu0 %v1738
  %1770 = vmatprep.subr.mxu0 0.0
  %1771 = vmatpush1.msra.mxu0 %v1739
  %1772 = vmatprep.subr.mxu0 0.0
  %1773 = vmatpush1.msra.mxu0 %v1740
  %1774 = vmatprep.subr.mxu0 0.0
  %1775 = vmatpush1.msra.mxu0 %v1741
  %1776 = vmatprep.subr.mxu0 0.0
  %1777 = vmatpush1.msra.mxu0 %v1742
  %1778 = vmatprep.subr.mxu0 0.0
  %1779 = vmatpush1.msra.mxu0 %v1743
  %1780 = vmatprep.subr.mxu0 0.0
  %1781 = vmatpush1.msra.mxu0 %v1744
  %1782 = vmatprep.subr.mxu0 0.0
  %1783 = vmatpush1.msra.mxu0 %v1745
  %1784 = vmatprep.subr.mxu0 0.0
  %1785 = vmatpush1.msra.mxu0 %v1746
  %1786 = vmatprep.subr.mxu0 0.0
  %1787 = vmatpush1.msra.mxu0 0.0
  %1788 = vmatprep.subr.mxu0 0.0
  %1789 = vmatpush1.msra.mxu0 0.0
  %1790 = vmatprep.subr.mxu0 0.0
  %1791 = vmatpush1.msra.mxu0 0.0
  %1792 = vmatprep.subr.mxu0 0.0
  %1793 = vmatpush1.msra.mxu0 0.0
  %1794 = vmatprep.subr.mxu0 0.0
  %1795 = vmatpush1.msra.mxu0 0.0
  %1796 = vmatprep.subr.mxu0 0.0
  %1797 = vmatpush1.msra.mxu0 0.0
  %1798 = vmatprep.subr.mxu0 0.0
  %1799 = vmatpush1.msra.mxu0 0.0
  %1800 = vmatprep.subr.mxu0 0.0
  %1801 = vmatpush1.msra.mxu0 0.0
  %1802 = vmatprep.subr.mxu0 0.0
  %1803 = vmatpush1.msra.mxu0 0.0
  %1804 = vmatprep.subr.mxu0 0.0
  %1805 = vmatpush1.msra.mxu0 0.0
  %1806 = vmatprep.subr.mxu0 0.0
  %1807 = vmatpush1.msra.mxu0 0.0
  %1808 = vmatprep.subr.mxu0 0.0
  %1809 = vmatpush1.msra.mxu0 0.0
  %1810 = vmatprep.subr.mxu0 0.0
  %1811 = vmatpush1.msra.mxu0 0.0
  %1812 = vmatprep.subr.mxu0 0.0
  %1813 = vmatpush1.msra.mxu0 0.0
  %1814 = vmatprep.subr.mxu0 0.0
  %1815 = vmatpush1.msra.mxu0 0.0
  %1816 = vmatprep.subr.mxu0 0.0
  %1817 = vmatpush1.msra.mxu0 0.0
  %1818 = vmatprep.mubr.f32.mxu0 0.0
  %1819 = vmatmul.mubr.f32.gmra.mrb[0].mxu0 %v1580
  %v1820 = vpop.f32.mrb[0].mxu0
  %v1821 = vadd.f32 %v1752, %v1820
  %v1822 = vpop.f32.mrb[0].mxu0
  %1823 = vmatprep.mubr.f32.mxu0 0.0
  %1824 = vmatmul.mubr.f32.gmra.mrb[0].mxu0 %v1582
  %v1825 = vpop.f32.mrb[0].mxu0
  %v1826 = vadd.f32 %v1752, %v1825
  %v1827 = vpop.f32.mrb[0].mxu0
  %1828 = vmatprep.mubr.f32.mxu0 0.0
  %1829 = vmatmul.mubr.f32.gmra.mrb[0].mxu0 %v1584
  %v1830 = vpop.f32.mrb[0].mxu0
  %v1831 = vadd.f32 %v1752, %v1830
  %v1832 = vpop.f32.mrb[0].mxu0
  %1833 = vmatprep.mubr.f32.mxu0 0.0
  %1834 = vmatmul.mubr.f32.gmra.mrb[0].mxu0 %v1586
  %v1835 = vpop.f32.mrb[0].mxu0
  %v1836 = vadd.f32 %v1752, %v1835
  %v1837 = vpop.f32.mrb[0].mxu0
  %1838 = vmatprep.mubr.f32.mxu0 0.0
  %1839 = vmatmul.mubr.f32.gmra.mrb[0].mxu0 %v1588
  %v1840 = vpop.f32.mrb[0].mxu0
  %v1841 = vadd.f32 %v1752, %v1840
  %v1842 = vpop.f32.mrb[0].mxu0
  %1843 = vmatprep.mubr.f32.mxu0 0.0
  %1844 = vmatmul.mubr.f32.gmra.mrb[0].mxu0 %v1590
  %v1845 = vpop.f32.mrb[0].mxu0
  %v1846 = vadd.f32 %v1752, %v1845
  %v1847 = vpop.f32.mrb[0].mxu0
  %1848 = vmatprep.mubr.f32.mxu0 0.0
  %1849 = vmatmul.mubr.f32.gmra.mrb[0].mxu0 %v1592
  %v1850 = vpop.f32.mrb[0].mxu0
  %v1851 = vadd.f32 %v1752, %v1850
  %v1852 = vpop.f32.mrb[0].mxu0
  %1853 = vmatprep.mubr.f32.mxu0 0.0
  %1854 = vmatmul.mubr.f32.gmra.mrb[0].mxu0 %v1594
  %v1855 = vpop.f32.mrb[0].mxu0
  %v1856 = vadd.f32 %v1752, %v1855
  %v1857 = vpop.f32.mrb[0].mxu0
  %1858 = vdwg.mxu0
  %vm1859 = vcmask 7168
  %1860 = vst.msk [vmem:[%s16] sm:$0xff] %vm1859, %v1821
  %1861 = vst.msk [vmem:[%s16 + $0x8] sm:$0xff] %vm1859, %v1826
  %1862 = vst.msk [vmem:[%s16 + $0x10] sm:$0xff] %vm1859, %v1831
  %1863 = vst.msk [vmem:[%s16 + $0x18] sm:$0xff] %vm1859, %v1836
  %1864 = vst.msk [vmem:[%s16 + $0x20] sm:$0xff] %vm1859, %v1841
  %1865 = vst.msk [vmem:[%s16 + $0x28] sm:$0xff] %vm1859, %v1846
  %1866 = vst.msk [vmem:[%s16 + $0x30] sm:$0xff] %vm1859, %v1851
  %1867 = vst.msk [vmem:[%s16 + $0x38] sm:$0xff] %vm1859, %v1856
  // Predicated region
  $region62: #{tpu_custom_call.1} parent=0 // pred_check
    _
  $region63: #{tpu_custom_call.1} parent=0 // pred_check_branch
    %1869 = sbr.rel (0) target = $region65
  $region64: #{tpu_custom_call.1} parent=0 // pred_region
    _
  $region65: #{tpu_custom_call.1} parent=0 // pred_fallthru
    _
  // Predicated region
  $region66: #{tpu_custom_call.1} parent=0 // pred_check
    _
  $region67: #{tpu_custom_call.1} parent=0 // pred_check_branch
    %1871 = sbr.rel (0) target = $region69
  $region68: #{tpu_custom_call.1} parent=0 // pred_region
    _
  $region69: #{tpu_custom_call.1} parent=0 // pred_fallthru
    _
  // Predicated region
  $region70: #{tpu_custom_call.1} parent=0 // pred_check
    _
  $region71: #{tpu_custom_call.1} parent=0 // pred_check_branch
    %1873 = sbr.rel (0) target = $region73
  $region72: #{tpu_custom_call.1} parent=0 // pred_region
    _
  $region73: #{tpu_custom_call.1} parent=0 // pred_fallthru
    _
  // Predicated region
  $region74: #{tpu_custom_call.1} parent=0 // pred_check
    _
  $region75: #{tpu_custom_call.1} parent=0 // pred_check_branch
    %1875 = sbr.rel (0) target = $region77
  $region76: #{tpu_custom_call.1} parent=0 // pred_region
    _
  $region77: #{tpu_custom_call.1} parent=0 // pred_fallthru
    _

</llo_original>
